<compile_context>
chip_gen: v6e
topology: v6e:2x2x1
jax: 0.10.0
libtpu: 0.0.40
codegen_flags: <defaults>
</compile_context>

<pallas_src>
import functools

import jax
import jax.numpy as jnp
from jax.experimental import pallas as pl
from jax.experimental.pallas import tpu as pltpu


_VMEM_LIMIT = 32 * 1024 * 1024   # safe on v5e/v6e (128 MiB) and v7x (64 MiB physical)


# ----------------------------------------------------------------------------
# Pallas kernel 1: fused matmul  (conv-as-im2col hot path), bf16 MXU operands
# ----------------------------------------------------------------------------
def _mm_kernel(x_ref, w_ref, s_ref, b_ref, *rest, relu, has_res):
    if has_res:
        r_ref, o_ref = rest
    else:
        (o_ref,) = rest
    y = jnp.dot(x_ref[...], w_ref[...], preferred_element_type=jnp.float32)
    y = y * s_ref[...] + b_ref[...]
    if has_res:
        y = y + r_ref[...].astype(jnp.float32)
    if relu:
        y = jnp.maximum(y, 0.0)
    o_ref[...] = y.astype(o_ref.dtype)


@functools.lru_cache(maxsize=None)
def _matmul_call(Mp, K, N, tm, relu, has_res):
    kernel = functools.partial(_mm_kernel, relu=relu, has_res=has_res)
    in_specs = [
        pl.BlockSpec((tm, K), lambda i: (i, 0)),
        pl.BlockSpec((K, N), lambda i: (0, 0)),
        pl.BlockSpec((1, N), lambda i: (0, 0)),
        pl.BlockSpec((1, N), lambda i: (0, 0)),
    ]
    if has_res:
        in_specs.append(pl.BlockSpec((tm, N), lambda i: (i, 0)))
    call = pl.pallas_call(
        kernel,
        out_shape=jax.ShapeDtypeStruct((Mp, N), jnp.float32),
        grid=(Mp // tm,),
        in_specs=in_specs,
        out_specs=pl.BlockSpec((tm, N), lambda i: (i, 0)),
        compiler_params=pltpu.CompilerParams(
            dimension_semantics=("parallel",),
            vmem_limit_bytes=_VMEM_LIMIT,
        ),
    )
    return jax.jit(call)


def _pick_tm(M, tm_max=512):
    Mp = ((M + 7) // 8) * 8
    if Mp <= tm_max:
        return Mp, Mp
    Mp = ((M + tm_max - 1) // tm_max) * tm_max
    return Mp, tm_max


def fused_matmul(x, w, scale, bias, residual=None, relu=True):
    """Y = [relu]((x @ w) * scale + bias [+ residual]); x:(M,K), w:(K,N). bf16 MXU."""
    M, K = x.shape
    N = w.shape[1]
    Mp, tm = _pick_tm(M)
    pad = Mp - M
    xb = x.astype(jnp.bfloat16)
    if pad:
        xb = jnp.pad(xb, ((0, pad), (0, 0)))
    args = [xb, w.astype(jnp.bfloat16),
            scale.reshape(1, N).astype(jnp.float32),
            bias.reshape(1, N).astype(jnp.float32)]
    has_res = residual is not None
    if has_res:
        r = residual.astype(jnp.bfloat16)
        if pad:
            r = jnp.pad(r, ((0, pad), (0, 0)))
        args.append(r)
    out = _matmul_call(Mp, K, N, tm, relu, has_res)(*args)
    return out[:M] if pad else out


# ----------------------------------------------------------------------------
# Pallas kernel 2: fused fire 1x1 path: squeeze-1x1+BN1 then expand-1x1+BN2a(+res,relu)
# Two outputs: (ya, bn1) -- bn1 feeds the depthwise branch without an extra launch.
# ----------------------------------------------------------------------------
def _fire1_kernel(x_ref, w1_ref, s1_ref, b1_ref, w2_ref, s2_ref, b2_ref, *rest,
                  relu, has_res):
    if has_res:
        r_ref, ya_ref, bn1_ref = rest
    else:
        ya_ref, bn1_ref = rest
    y1 = jnp.dot(x_ref[...], w1_ref[...], preferred_element_type=jnp.float32)
    y1 = y1 * s1_ref[...] + b1_ref[...]                     # bn1 (no relu, per torch)
    bn1_ref[...] = y1.astype(bn1_ref.dtype)
    y2 = jnp.dot(y1.astype(jnp.bfloat16), w2_ref[...],
                 preferred_element_type=jnp.float32)
    y2 = y2 * s2_ref[...] + b2_ref[...]
    if has_res:
        y2 = y2 + r_ref[...].astype(jnp.float32)
    if relu:
        y2 = jnp.maximum(y2, 0.0)
    ya_ref[...] = y2.astype(ya_ref.dtype)


@functools.lru_cache(maxsize=None)
def _fire1_call(Mp, Cin, S, half, tm, relu, has_res):
    kernel = functools.partial(_fire1_kernel, relu=relu, has_res=has_res)
    in_specs = [
        pl.BlockSpec((tm, Cin), lambda i: (i, 0)),
        pl.BlockSpec((Cin, S), lambda i: (0, 0)),
        pl.BlockSpec((1, S), lambda i: (0, 0)),
        pl.BlockSpec((1, S), lambda i: (0, 0)),
        pl.BlockSpec((S, half), lambda i: (0, 0)),
        pl.BlockSpec((1, half), lambda i: (0, 0)),
        pl.BlockSpec((1, half), lambda i: (0, 0)),
    ]
    if has_res:
        in_specs.append(pl.BlockSpec((tm, half), lambda i: (i, 0)))
    call = pl.pallas_call(
        kernel,
        out_shape=(jax.ShapeDtypeStruct((Mp, half), jnp.float32),
                   jax.ShapeDtypeStruct((Mp, S), jnp.float32)),
        grid=(Mp // tm,),
        in_specs=in_specs,
        out_specs=(pl.BlockSpec((tm, half), lambda i: (i, 0)),
                   pl.BlockSpec((tm, S), lambda i: (i, 0))),
        compiler_params=pltpu.CompilerParams(
            dimension_semantics=("parallel",),
            vmem_limit_bytes=_VMEM_LIMIT,
        ),
    )
    return jax.jit(call)


def fire_conv1x1_fused(x, w1, s1, b1, w2, s2, b2, residual=None, relu=True):
    """x:(B,H,W,Cin); w1 torch (S,Cin,1,1); w2 torch (half,S,1,1). Returns (ya, bn1)."""
    B, H, W, Cin = x.shape
    S = w1.shape[0]
    half = w2.shape[0]
    M = B * H * W
    Mp, tm = _pick_tm(M)
    pad = Mp - M
    xm = x.reshape(M, Cin).astype(jnp.bfloat16)
    if pad:
        xm = jnp.pad(xm, ((0, pad), (0, 0)))
    w1m = jnp.transpose(w1.reshape(S, Cin), (1, 0)).astype(jnp.bfloat16)     # (Cin,S)
    w2m = jnp.transpose(w2.reshape(half, S), (1, 0)).astype(jnp.bfloat16)    # (S,half)
    args = [xm, w1m,
            s1.reshape(1, S).astype(jnp.float32), b1.reshape(1, S).astype(jnp.float32),
            w2m,
            s2.reshape(1, half).astype(jnp.float32), b2.reshape(1, half).astype(jnp.float32)]
    has_res = residual is not None
    if has_res:
        r = residual.reshape(M, half).astype(jnp.bfloat16)
        if pad:
            r = jnp.pad(r, ((0, pad), (0, 0)))
        args.append(r)
    ya, bn1 = _fire1_call(Mp, Cin, S, half, tm, relu, has_res)(*args)
    if pad:
        ya, bn1 = ya[:M], bn1[:M]
    return ya.reshape(B, H, W, half), bn1.reshape(B, H, W, S)


# ----------------------------------------------------------------------------
# Pallas kernel 3: depthwise 3x3, stride 1, pad 1, fused BN affine (+res, relu)
# Grid (B, H/hblk): the accumulator only covers an hblk-row slab (bounded vreg/VMEM use).
# ----------------------------------------------------------------------------
def _dw_kernel(x_ref, k_ref, s_ref, b_ref, *rest, relu, has_res, hblk, W):
    if has_res:
        r_ref, o_ref = rest
    else:
        (o_ref,) = rest
    C = o_ref.shape[-1]
    row0 = pl.program_id(1) * hblk
    acc = jnp.zeros((hblk, W, C), jnp.float32)
    for dh in range(3):
        xrow = x_ref[0, pl.ds(row0 + dh, hblk), :, :]        # (hblk, W+2, C)
        for dw in range(3):
            tap = k_ref[dh, dw:dw + 1, :]                    # (1, C)
            acc = acc + xrow[:, dw:dw + W, :] * tap
    y = acc * s_ref[...] + b_ref[...]
    if has_res:
        y = y + r_ref[0]
    if relu:
        y = jnp.maximum(y, 0.0)
    o_ref[0] = y.astype(o_ref.dtype)


@functools.lru_cache(maxsize=None)
def _dw_call(B, H, W, C, hblk, relu, has_res):
    kernel = functools.partial(_dw_kernel, relu=relu, has_res=has_res, hblk=hblk, W=W)
    in_specs = [
        pl.BlockSpec((1, H + 2, W + 2, C), lambda n, h: (n, 0, 0, 0)),
        pl.BlockSpec((3, 3, C), lambda n, h: (0, 0, 0)),
        pl.BlockSpec((1, C), lambda n, h: (0, 0)),
        pl.BlockSpec((1, C), lambda n, h: (0, 0)),
    ]
    if has_res:
        in_specs.append(pl.BlockSpec((1, hblk, W, C), lambda n, h: (n, h, 0, 0)))
    call = pl.pallas_call(
        kernel,
        out_shape=jax.ShapeDtypeStruct((B, H, W, C), jnp.float32),
        grid=(B, H // hblk),
        in_specs=in_specs,
        out_specs=pl.BlockSpec((1, hblk, W, C), lambda n, h: (n, h, 0, 0)),
        compiler_params=pltpu.CompilerParams(
            dimension_semantics=("parallel", "parallel"),
            vmem_limit_bytes=_VMEM_LIMIT,
        ),
    )
    return jax.jit(call)


def depthwise3x3(x, w, scale, bias, residual=None, relu=True):
    """x:(B,H,W,C) NHWC f32, w:(3,3,C). Stride-1 pad-1 depthwise conv, fused BN affine."""
    B, H, W, C = x.shape
    hblk = 8 if H % 8 == 0 else H
    xp = jnp.pad(x, ((0, 0), (1, 1), (1, 1), (0, 0))).astype(jnp.float32)
    args = [xp, w.astype(jnp.float32),
            scale.reshape(1, C).astype(jnp.float32),
            bias.reshape(1, C).astype(jnp.float32)]
    has_res = residual is not None
    if has_res:
        args.append(residual.astype(jnp.float32))
    return _dw_call(B, H, W, C, hblk, relu, has_res)(*args)


# ----------------------------------------------------------------------------
# Pallas kernel 4: depthwise 3x3, stride 2, pad 1 -- computes only strided outputs.
# The 9 strided taps are gathered in XLA and stacked along rows; the kernel does 9 MACs.
# ----------------------------------------------------------------------------
def _dw_s2_kernel(xs_ref, k_ref, s_ref, b_ref, o_ref, *, relu, Ho):
    acc = jnp.zeros(o_ref.shape[1:], jnp.float32)            # (Ho, Wo, C)
    for t in range(9):
        acc = acc + xs_ref[0, t * Ho:(t + 1) * Ho, :, :] * k_ref[t:t + 1, :]
    y = acc * s_ref[...] + b_ref[...]
    if relu:
        y = jnp.maximum(y, 0.0)
    o_ref[0] = y.astype(o_ref.dtype)


@functools.lru_cache(maxsize=None)
def _dw_s2_call(B, Ho, Wo, C, relu):
    kernel = functools.partial(_dw_s2_kernel, relu=relu, Ho=Ho)
    call = pl.pallas_call(
        kernel,
        out_shape=jax.ShapeDtypeStruct((B, Ho, Wo, C), jnp.float32),
        grid=(B,),
        in_specs=[
            pl.BlockSpec((1, 9 * Ho, Wo, C), lambda n: (n, 0, 0, 0)),
            pl.BlockSpec((9, C), lambda n: (0, 0)),
            pl.BlockSpec((1, C), lambda n: (0, 0)),
            pl.BlockSpec((1, C), lambda n: (0, 0)),
        ],
        out_specs=pl.BlockSpec((1, Ho, Wo, C), lambda n: (n, 0, 0, 0)),
        compiler_params=pltpu.CompilerParams(
            dimension_semantics=("parallel",),
            vmem_limit_bytes=_VMEM_LIMIT,
        ),
    )
    return jax.jit(call)


def depthwise3x3_s2(x, w, scale, bias, relu=True):
    """Depthwise 3x3, stride 2, pad 1; x:(B,H,W,C) f32 (H,W even), w:(3,3,C)."""
    B, H, W, C = x.shape
    Ho, Wo = H // 2, W // 2
    xp = jnp.pad(x, ((0, 0), (1, 1), (1, 1), (0, 0))).astype(jnp.float32)
    taps = [xp[:, dh:dh + 2 * Ho - 1:2, dw:dw + 2 * Wo - 1:2, :]
            for dh in range(3) for dw in range(3)]
    xs = jnp.concatenate(taps, axis=1)                       # (B, 9*Ho, Wo, C)
    return _dw_s2_call(B, Ho, Wo, C, relu)(
        xs, w.reshape(9, C).astype(jnp.float32),
        scale.reshape(1, C).astype(jnp.float32),
        bias.reshape(1, C).astype(jnp.float32))


# ----------------------------------------------------------------------------
# Plain-JAX glue: im2col, conv wrappers (matmuls themselves run in the Pallas kernels)
# ----------------------------------------------------------------------------
def conv2d_im2col(x, w, scale, bias, stride=1, pad=0, relu=True, residual=None):
    """x NHWC, w in torch layout (Cout, Cin, kh, kw); cross-correlation like nn.Conv2d."""
    B, H, W, C = x.shape
    Cout, Cin, kh, kw = w.shape
    assert Cin == C
    x = x.astype(jnp.bfloat16)       # bf16 patches: halves im2col HBM traffic, native MXU
    xp = jnp.pad(x, ((0, 0), (pad, pad), (pad, pad), (0, 0))) if pad else x
    Ho = (H + 2 * pad - kh) // stride + 1
    Wo = (W + 2 * pad - kw) // stride + 1
    cols = []
    for i in range(kh):
        for j in range(kw):
            cols.append(xp[:, i:i + stride * (Ho - 1) + 1:stride,
                           j:j + stride * (Wo - 1) + 1:stride, :])
    patches = jnp.concatenate(cols, axis=-1).reshape(B * Ho * Wo, kh * kw * C)
    wm = jnp.transpose(w, (2, 3, 1, 0)).reshape(kh * kw * C, Cout)
    res = None if residual is None else residual.reshape(B * Ho * Wo, Cout)
    y = fused_matmul(patches, wm, scale, bias, residual=res, relu=relu)
    return y.reshape(B, Ho, Wo, Cout)


def conv_transpose_4x4_s2(x, w, b, residual=None, relu=False):
    """nn.ConvTranspose2d(C, C, 4, stride=2, padding=1); w torch layout (Cin, Cout, 4, 4).
    Parity decomposition: output parity (p,q) is a 2x2 conv over the un-dilated input
    (K = 4*C instead of 16*C -> no zero-FLOP waste)."""
    B, H, W, C = x.shape
    Cout = w.shape[1]
    xp = jnp.pad(x, ((0, 0), (1, 1), (1, 1), (0, 0)))
    KH = ((3, 1), (2, 0))            # kernel-row taps for output row parity 0 / 1
    KW = ((3, 1), (2, 0))
    ones = jnp.ones((Cout,), jnp.float32)
    rows = []
    for p_ in (0, 1):
        cols = []
        for q_ in (0, 1):
            wk = jnp.stack(
                [jnp.stack([w[:, :, KH[p_][dh], KW[q_][dw]] for dw in (0, 1)], axis=-1)
                 for dh in (0, 1)], axis=-2)                  # (Cin, Cout, 2, 2)
            wk = jnp.transpose(wk, (1, 0, 2, 3))              # torch conv layout
            xs = xp[:, p_:p_ + H + 1, q_:q_ + W + 1, :]
            res = None if residual is None else residual[:, p_::2, q_::2, :]
            cols.append(conv2d_im2col(xs, wk, ones, b, stride=1, pad=0,
                                      relu=relu, residual=res))
        rows.append(jnp.stack(cols, axis=3))                  # (B, H, W, 2, C)
    y = jnp.stack(rows, axis=2)                               # (B, H, 2, W, 2, C)
    return y.reshape(B, 2 * H, 2 * W, Cout)


# ----------------------------------------------------------------------------
# Deterministic synthetic parameters
# ----------------------------------------------------------------------------
class ParamRNG:
    def __init__(self, seed):
        self._key = jax.random.PRNGKey(seed)

    def next(self):
        self._key, k = jax.random.split(self._key)
        return k


def conv_w(rng, cout, cin, kh, kw):
    fan_in = cin * kh * kw
    return jax.random.normal(rng.next(), (cout, cin, kh, kw), jnp.float32) * (2.0 / fan_in) ** 0.5


def bn_params(rng, c):
    gamma = 1.0 + 0.1 * jax.random.normal(rng.next(), (c,), jnp.float32)
    beta = 0.1 * jax.random.normal(rng.next(), (c,), jnp.float32)
    mean = 0.1 * jax.random.normal(rng.next(), (c,), jnp.float32)
    var = jnp.abs(1.0 + 0.1 * jax.random.normal(rng.next(), (c,), jnp.float32))
    scale = gamma / jnp.sqrt(var + 1e-5)
    bias = beta - mean * scale
    return scale, bias


def make_fire(rng, inp, out, stride=1, sr=2):
    sq = out // sr
    return {
        "w1": conv_w(rng, sq, inp, 1, 1),
        "bn1": bn_params(rng, sq),
        "w_1x1": conv_w(rng, out // 2, sq, 1, 1),
        "w_3x3": conv_w(rng, out // 2, 1, 3, 3),   # groups == sq == out//2 -> depthwise
        "bn2": bn_params(rng, out),
        "stride": stride,
        "skip": (stride == 1 and inp == out),
    }


def make_convolution(rng, k, inp, out, stride=1):
    return {"k": k, "stride": stride,
            "w": conv_w(rng, out, inp, k, k), "bn": bn_params(rng, out)}


def make_residual(rng, inp, out, k=3, stride=1):
    p = {"k": k, "stride": stride,
         "w1": conv_w(rng, out, inp, k, k), "bn1": bn_params(rng, out),
         "w2": conv_w(rng, out, out, k, k), "bn2": bn_params(rng, out),
         "has_skip": (stride != 1 or inp != out)}
    if p["has_skip"]:
        p["ws"] = conv_w(rng, out, inp, 1, 1)
        p["bns"] = bn_params(rng, out)
    return p


def make_merge_mod(rng):
    return {"w": conv_w(rng, 256, 256, 1, 1), "bn": bn_params(rng, 256)}


def make_layer_p(rng, inp, out, modules):
    return [make_fire(rng, inp, out)] + [make_fire(rng, out, out) for _ in range(modules - 1)]


def make_hg_layer_p(rng, inp, out, modules):
    return [make_fire(rng, inp, out, stride=2)] + [make_fire(rng, out, out) for _ in range(modules - 1)]


def make_layer_revr_p(rng, inp, out, modules):
    return [make_fire(rng, inp, inp) for _ in range(modules - 1)] + [make_fire(rng, inp, out)]


def make_hg_module(rng, n, dims, modules):
    curr_mod, next_mod = modules[0], modules[1]
    curr_dim, next_dim = dims[0], dims[1]
    p = {"n": n}
    p["up1"] = make_layer_p(rng, curr_dim, curr_dim, curr_mod)
    p["low1"] = make_hg_layer_p(rng, curr_dim, next_dim, curr_mod)
    if n > 1:
        p["low2"] = make_hg_module(rng, n - 1, dims[1:], modules[1:])
    else:
        p["low2"] = make_layer_p(rng, next_dim, next_dim, next_mod)
    p["low3"] = make_layer_revr_p(rng, next_dim, curr_dim, curr_mod)
    p["up2_w"] = jax.random.normal(rng.next(), (curr_dim, curr_dim, 4, 4), jnp.float32) * (2.0 / (curr_dim * 16)) ** 0.5
    p["up2_b"] = 0.01 * jax.random.normal(rng.next(), (curr_dim,), jnp.float32)
    return p


def make_hourglass_squeeze(rng, channels=3):
    stacks = 2
    return {
        "pre": [make_convolution(rng, 7, channels, 128, stride=2),
                make_residual(rng, 128, 256, stride=2),
                make_residual(rng, 256, 256, stride=2)],
        "hgs": [make_hg_module(rng, 4, [256, 256, 384, 384, 512], [2, 2, 2, 2, 4]) for _ in range(stacks)],
        "cnvs": [make_convolution(rng, 3, 256, 256) for _ in range(stacks)],
        "inters": [make_residual(rng, 256, 256) for _ in range(stacks - 1)],
        "cnvs_": [make_merge_mod(rng) for _ in range(stacks - 1)],
        "inters_": [make_merge_mod(rng) for _ in range(stacks - 1)],
    }


# ----------------------------------------------------------------------------
# Module forwards (all heavy math goes through the Pallas kernels)
# ----------------------------------------------------------------------------
def fire_forward(p, x):
    half = p["w_1x1"].shape[0]
    stride = p["stride"]
    s1, b1 = p["bn1"]
    s2, b2 = p["bn2"]
    res_a = x[..., :half] if p["skip"] else None
    res_b = x[..., half:] if p["skip"] else None
    w_dw = jnp.transpose(p["w_3x3"][:, 0, :, :], (1, 2, 0))       # (3,3,half)
    if stride == 1:
        # fused squeeze-1x1 + expand-1x1 (one pallas_call, bn1 kept for the dw branch)
        ya, bn1 = fire_conv1x1_fused(x, p["w1"], s1, b1, p["w_1x1"],
                                     s2[:half], b2[:half], residual=res_a, relu=True)
        yb = depthwise3x3(bn1, w_dw, s2[half:], b2[half:], residual=res_b, relu=True)
    else:
        bn1 = conv2d_im2col(x, p["w1"], s1, b1, stride=1, pad=0, relu=False)
        ya = conv2d_im2col(bn1, p["w_1x1"], s2[:half], b2[:half],
                           stride=stride, pad=0, relu=True)
        yb = depthwise3x3_s2(bn1, w_dw, s2[half:], b2[half:], relu=True)
    # TODO(synk): for 384-dim fires half=192 makes this concat lane-misaligned in XLA; a
    # fully-fused fire kernel writing one lane-dense output would remove that relayout.
    return jnp.concatenate([ya, yb], axis=-1)


def seq_fire(plist, x):
    for fp in plist:
        x = fire_forward(fp, x)
    return x


def convolution_forward(p, x):
    k = p["k"]
    s, b = p["bn"]
    return conv2d_im2col(x, p["w"], s, b, stride=p["stride"], pad=(k - 1) // 2, relu=True)


def residual_forward(p, x):
    k = p["k"]
    pad = (k - 1) // 2
    s1, b1 = p["bn1"]
    h = conv2d_im2col(x, p["w1"], s1, b1, stride=p["stride"], pad=pad, relu=True)
    if p["has_skip"]:
        ss, bs = p["bns"]
        skip = conv2d_im2col(x, p["ws"], ss, bs, stride=p["stride"], pad=0, relu=False)
    else:
        skip = x
    s2, b2 = p["bn2"]
    return conv2d_im2col(h, p["w2"], s2, b2, stride=1, pad=pad, relu=True, residual=skip)


def merge_mod_forward(p, x, residual=None, relu=False):
    s, b = p["bn"]
    return conv2d_im2col(x, p["w"], s, b, stride=1, pad=0, relu=relu, residual=residual)


def hg_module_forward(p, x):
    up1 = seq_fire(p["up1"], x)
    max1 = x                                   # make_pool_layer -> identity
    low1 = seq_fire(p["low1"], max1)
    if p["n"] > 1:
        low2 = hg_module_forward(p["low2"], low1)
    else:
        low2 = seq_fire(p["low2"], low1)
    low3 = seq_fire(p["low3"], low2)
    # up2 = ConvTranspose2d(4,2,1); merge layer (up1 + up2) fused as residual add
    return conv_transpose_4x4_s2(low3, p["up2_w"], p["up2_b"], residual=up1, relu=False)


def hourglass_forward(params, x_nchw):
    x = jnp.transpose(x_nchw, (0, 2, 3, 1)).astype(jnp.float32)   # NCHW -> NHWC
    inter = x
    for i, mod in enumerate(params["pre"]):
        inter = convolution_forward(mod, inter) if i == 0 else residual_forward(mod, inter)
    outs = []
    nstack = len(params["hgs"])
    for ind in range(nstack):
        h = hg_module_forward(params["hgs"][ind], inter)
        cnv = convolution_forward(params["cnvs"][ind], h)
        outs.append(jnp.transpose(cnv, (0, 3, 1, 2)))             # back to NCHW
        if ind < nstack - 1:
            a = merge_mod_forward(params["inters_"][ind], inter, relu=False)
            inter = merge_mod_forward(params["cnvs_"][ind], cnv, residual=a, relu=True)
            inter = residual_forward(params["inters"][ind], inter)
    return outs


# ----------------------------------------------------------------------------
if __name__ == "__main__":
    # NOTE: spatial size must be a multiple of 128 so that the 3 stride-2 "pre" stages
    # and all 4 hourglass down/up levels align (smallest clean size); batch=2, channels=3.
    params = make_hourglass_squeeze(ParamRNG(42), channels=3)
    x = jax.random.normal(jax.random.PRNGKey(0), (2, 3, 128, 128), jnp.float32)

    outs = hourglass_forward(params, x)
    outs = [jax.block_until_ready(o) for o in outs]

    assert len(outs) == 2
    for o in outs:
        assert o.shape == (2, 256, 16, 16), o.shape
        assert bool(jnp.all(jnp.isfinite(o)))
    print("KERNEL_OK")
</pallas_src>

<mosaic_0001>
module attributes {stable_mosaic.version = 11 : i64} {
  func.func @_mm_kernel(%arg0: i32, %arg1: memref<512x147xbf16, #tpu.memory_space<vmem>>, %arg2: memref<147x128xbf16, #tpu.memory_space<vmem>>, %arg3: memref<1x128xf32, #tpu.memory_space<vmem>>, %arg4: memref<1x128xf32, #tpu.memory_space<vmem>>, %arg5: memref<512x128xf32, #tpu.memory_space<vmem>>) attributes {dimension_semantics = [#tpu.dimension_semantics<parallel>], iteration_bounds = array<i64: 16>, scalar_prefetch = 0 : i64, scratch_operands = 0 : i64, tpu.core_type = #tpu.core_type<tc>, window_params = [{transform_indices = @transform_0, window_bounds = array<i64: 512, 147>}, {pipeline_mode = #tpu.pipeline_mode<synchronous>, transform_indices = @transform_1, window_bounds = array<i64: 147, 128>}, {pipeline_mode = #tpu.pipeline_mode<synchronous>, transform_indices = @transform_2, window_bounds = array<i64: 1, 128>}, {pipeline_mode = #tpu.pipeline_mode<synchronous>, transform_indices = @transform_3, window_bounds = array<i64: 1, 128>}, {transform_indices = @transform_4, window_bounds = array<i64: 512, 128>}]} {
    %c0 = arith.constant 0 : index
    %c0_0 = arith.constant 0 : index
    %0 = vector.load %arg1[%c0, %c0_0] : memref<512x147xbf16, #tpu.memory_space<vmem>>, vector<512x147xbf16>
    %c0_1 = arith.constant 0 : index
    %c0_2 = arith.constant 0 : index
    %1 = vector.load %arg2[%c0_1, %c0_2] : memref<147x128xbf16, #tpu.memory_space<vmem>>, vector<147x128xbf16>
    %cst = arith.constant dense<0.000000e+00> : vector<512x128xf32>
    %2 = tpu.matmul %0, %1, %cst {dimension_numbers = #tpu.dot_dimension_numbers<[1], [0], [0], [1], [0, 0, 1, 1], [], []>} : vector<512x147xbf16>, vector<147x128xbf16>, vector<512x128xf32> -> vector<512x128xf32>
    %c0_3 = arith.constant 0 : index
    %c0_4 = arith.constant 0 : index
    %3 = vector.load %arg3[%c0_3, %c0_4] : memref<1x128xf32, #tpu.memory_space<vmem>>, vector<1x128xf32>
    %4 = vector.broadcast %3 : vector<1x128xf32> to vector<512x128xf32>
    %5 = arith.mulf %2, %4 : vector<512x128xf32>
    %c0_5 = arith.constant 0 : index
    %c0_6 = arith.constant 0 : index
    %6 = vector.load %arg4[%c0_5, %c0_6] : memref<1x128xf32, #tpu.memory_space<vmem>>, vector<1x128xf32>
    %7 = vector.broadcast %6 : vector<1x128xf32> to vector<512x128xf32>
    %8 = arith.addf %5, %7 : vector<512x128xf32>
    %cst_7 = arith.constant 0.000000e+00 : f32
    %9 = vector.broadcast %cst_7 : f32 to vector<512x128xf32>
    %10 = arith.maximumf %8, %9 : vector<512x128xf32>
    %c0_8 = arith.constant 0 : index
    %c0_9 = arith.constant 0 : index
    %11 = vector.load %arg5[%c0_8, %c0_9] : memref<512x128xf32, #tpu.memory_space<vmem>>, vector<512x128xf32>
    tpu.vector_store %arg5[%c0_8, %c0_9], %10 {strides = array<i32>} : memref<512x128xf32, #tpu.memory_space<vmem>>, vector<512x128xf32>,
    return
  }
  func.func @transform_0(%arg0: i32) -> (i32, i32) {
    %c0_i32 = arith.constant 0 : i32
    %c0_i32_0 = arith.constant 0 : i32
    return %arg0, %c0_i32 : i32, i32
  }
  func.func @transform_1(%arg0: i32) -> (i32, i32) {
    %c0_i32 = arith.constant 0 : i32
    %c0_i32_0 = arith.constant 0 : i32
    %c0_i32_1 = arith.constant 0 : i32
    return %c0_i32, %c0_i32_0 : i32, i32
  }
  func.func @transform_2(%arg0: i32) -> (i32, i32) {
    %c0_i32 = arith.constant 0 : i32
    %c0_i32_0 = arith.constant 0 : i32
    %c0_i32_1 = arith.constant 0 : i32
    return %c0_i32, %c0_i32_0 : i32, i32
  }
  func.func @transform_3(%arg0: i32) -> (i32, i32) {
    %c0_i32 = arith.constant 0 : i32
    %c0_i32_0 = arith.constant 0 : i32
    %c0_i32_1 = arith.constant 0 : i32
    return %c0_i32, %c0_i32_0 : i32, i32
  }
  func.func @transform_4(%arg0: i32) -> (i32, i32) {
    %c0_i32 = arith.constant 0 : i32
    %c0_i32_0 = arith.constant 0 : i32
    return %arg0, %c0_i32 : i32, i32
  }
}

</mosaic_0001>

<llo_original>
// kernel: tpu_custom_call.1
$region0: #{tpu_custom_call.1}
  #allocation0 [shape = 'u32[]', space=smem, size = 0x4, offset = 0x4, fixed_abs, tag = 'smem constant byte address 0x4 - core index']
  #allocation1 [shape = 'u32[144,128]{1,0:T(1,128)}', space=vmem, size = 0x12000, scoped, tag = 'internal scratch']
  %s0 = inlined_call_operand.vmem [shape: bf16[8192,147], index: 0, kind: input, shape index: {}]
  %s1 = inlined_call_operand.vmem [shape: bf16[147,128], index: 1, kind: input, shape index: {}]
  %s2 = inlined_call_operand.vmem [shape: f32[1,128], index: 2, kind: input, shape index: {}]
  %s3 = inlined_call_operand.vmem [shape: f32[1,128], index: 3, kind: input, shape index: {}]
  %s4 = inlined_call_operand.hbm [shape: f32[8192,128], index: 4, kind: output, shape index: {}]
  %s5 = sld [smem:[#allocation0]]
  $region49: #{tpu_custom_call.1} parent=0
    _
  %s7 = ssub.s32 1, %s5
  %s8 = scalar_select 0, %s7, %s5
  $region1: #{tpu_custom_call.1} parent=0
    #allocation2 [shape = 'u8[524288]{0}', space=vmem, size = 0x80000, scoped, tag = 'output window, operand 0']
    #allocation3 [shape = 's32[2]{0}', space=sflag, size = 0x8, scoped, tag = 'scoped memory for tpu_custom_call.1']
    %9 = vsyncpa [#allocation3], 0
    %s10 = scalar_lea.sflag [#allocation3], 1
    %11 = vsyncpa %s10, 0
    loop: start=0, step=1, limit=18
    $region2: #{tpu_custom_call.1} parent=1 // loop_pre_header
      _
    $region3: #{tpu_custom_call.1} parent=1 // loop_header
      %s13 = sphi 0, %s17
      %p14 = scmp.ge.s32.totalorder %s13, 18
      %s23 = sphi 0, %s25
      %s26 = sphi 0, %s23
      %s27 = sphi 0, %s26
      %s43 = sphi 0, %s27
      %s47 = sphi 0, %s47
      %s49 = sphi 0, %s47
      %s50 = sphi 0, %s49
      %s64 = sphi 0, %s50
      %s68 = sphi 0, %s68
      %s70 = sphi 0, %s68
      %s71 = sphi 0, %s70
      %s85 = sphi 0, %s71
      %s89 = sphi 0, %s89
      %s91 = sphi 0, %s89
      %s92 = sphi 0, %s91
      %s106 = sphi 0, %s92
      %s112 = sphi 0, %s114
      %s115 = sphi 0, %s112
      %s116 = sphi 0, %s115
      %s132 = sphi 0, %s116
    $region4: #{tpu_custom_call.1} parent=1 // loop_header_branch
      %16 = sbr.rel (%p14) target = $region8
    $region5: #{tpu_custom_call.1} parent=1 // loop_body
      %s18 = ssub.s32 %s13, 1
      %s19 = ssub.s32 %s13, 2
      %s20 = sadd.s32 %s13, 1
      %s21 = ssub.s32 %s13, %s20
      %p22 = scmp.eq.s32.totalorder %s21, 0
      %s24 = sadd.s32 %s23, 1
      %s25 = scalar_select %p22, %s23, %s24
      %p28 = pneg %p22
      %p29 = scmp.eq.s32.totalorder %s13, 15
      %p30 = por %p28, %p29
      %p31 = scmp.ne.s32.totalorder %s23, %s26
      %p32 = scmp.eq.s32.totalorder %s13, 0
      %p33 = por %p31, %p32
      %p34 = scmp.ne.s32.totalorder %s23, %s26
      %p35 = scmp.eq.s32.totalorder %s18, 15
      %p36 = por %p34, %p35
      %p37 = scmp.ne.s32.totalorder %s26, %s27
      %p38 = scmp.eq.s32.totalorder %s18, 0
      %p39 = por %p37, %p38
      %p40 = scmp.ne.s32.totalorder %s26, %s27
      %p41 = scmp.eq.s32.totalorder %s19, 15
      %p42 = por %p40, %p41
      %p44 = scmp.ne.s32.totalorder %s27, %s43
      %p45 = scmp.eq.s32.totalorder %s19, 0
      %p46 = por %p44, %p45
      %s48 = sadd.s32 %s47, 1
      %p51 = scmp.eq.s32.totalorder %s13, 15
      %p52 = scmp.ne.s32.totalorder %s47, %s49
      %p53 = scmp.eq.s32.totalorder %s13, 0
      %p54 = por %p52, %p53
      %p55 = scmp.ne.s32.totalorder %s47, %s49
      %p56 = scmp.eq.s32.totalorder %s18, 15
      %p57 = por %p55, %p56
      %p58 = scmp.ne.s32.totalorder %s49, %s50
      %p59 = scmp.eq.s32.totalorder %s18, 0
      %p60 = por %p58, %p59
      %p61 = scmp.ne.s32.totalorder %s49, %s50
      %p62 = scmp.eq.s32.totalorder %s19, 15
      %p63 = por %p61, %p62
      %p65 = scmp.ne.s32.totalorder %s50, %s64
      %p66 = scmp.eq.s32.totalorder %s19, 0
      %p67 = por %p65, %p66
      %s69 = sadd.s32 %s68, 1
      %p72 = scmp.eq.s32.totalorder %s13, 15
      %p73 = scmp.ne.s32.totalorder %s68, %s70
      %p74 = scmp.eq.s32.totalorder %s13, 0
      %p75 = por %p73, %p74
      %p76 = scmp.ne.s32.totalorder %s68, %s70
      %p77 = scmp.eq.s32.totalorder %s18, 15
      %p78 = por %p76, %p77
      %p79 = scmp.ne.s32.totalorder %s70, %s71
      %p80 = scmp.eq.s32.totalorder %s18, 0
      %p81 = por %p79, %p80
      %p82 = scmp.ne.s32.totalorder %s70, %s71
      %p83 = scmp.eq.s32.totalorder %s19, 15
      %p84 = por %p82, %p83
      %p86 = scmp.ne.s32.totalorder %s71, %s85
      %p87 = scmp.eq.s32.totalorder %s19, 0
      %p88 = por %p86, %p87
      %s90 = sadd.s32 %s89, 1
      %p93 = scmp.eq.s32.totalorder %s13, 15
      %p94 = scmp.ne.s32.totalorder %s89, %s91
      %p95 = scmp.eq.s32.totalorder %s13, 0
      %p96 = por %p94, %p95
      %p97 = scmp.ne.s32.totalorder %s89, %s91
      %p98 = scmp.eq.s32.totalorder %s18, 15
      %p99 = por %p97, %p98
      %p100 = scmp.ne.s32.totalorder %s91, %s92
      %p101 = scmp.eq.s32.totalorder %s18, 0
      %p102 = por %p100, %p101
      %p103 = scmp.ne.s32.totalorder %s91, %s92
      %p104 = scmp.eq.s32.totalorder %s19, 15
      %p105 = por %p103, %p104
      %p107 = scmp.ne.s32.totalorder %s92, %s106
      %p108 = scmp.eq.s32.totalorder %s19, 0
      %p109 = por %p107, %p108
      %s110 = ssub.s32 %s13, %s20
      %p111 = scmp.eq.s32.totalorder %s110, 0
      %s113 = sadd.s32 %s112, 1
      %s114 = scalar_select %p111, %s112, %s113
      %p117 = pneg %p111
      %p118 = scmp.eq.s32.totalorder %s13, 15
      %p119 = por %p117, %p118
      %p120 = scmp.ne.s32.totalorder %s112, %s115
      %p121 = scmp.eq.s32.totalorder %s13, 0
      %p122 = por %p120, %p121
      %p123 = scmp.ne.s32.totalorder %s112, %s115
      %p124 = scmp.eq.s32.totalorder %s18, 15
      %p125 = por %p123, %p124
      %p126 = scmp.ne.s32.totalorder %s115, %s116
      %p127 = scmp.eq.s32.totalorder %s18, 0
      %p128 = por %p126, %p127
      %p129 = scmp.ne.s32.totalorder %s115, %s116
      %p130 = scmp.eq.s32.totalorder %s19, 15
      %p131 = por %p129, %p130
      %p133 = scmp.ne.s32.totalorder %s116, %s132
      %p134 = scmp.eq.s32.totalorder %s19, 0
      %p135 = por %p133, %p134
      %p136 = scmp.le.s32.totalorder 1, %s13
      %p137 = scmp.lt.s32.totalorder %s13, 17
      %p138 = pnand %p136, %p137
      %p139 = pneg %p138
      // Predicated region
      $region9: #{tpu_custom_call.1} parent=5 // pred_check
        _
      $region10: #{tpu_custom_call.1} parent=5 // pred_check_branch
        %141 = sbr.rel (%p138) target = $region12
      $region11: #{tpu_custom_call.1} parent=5 // pred_region
        %s142 = ssub.s32 %s13, 1
        // Predicated region
        $region13: #{tpu_custom_call.1} parent=11 // pred_check
          %p143 = pneg %p60
        $region14: #{tpu_custom_call.1} parent=11 // pred_check_branch
          %145 = sbr.rel (%p143) target = $region16
        $region15: #{tpu_custom_call.1} parent=11 // pred_region
          _
        $region16: #{tpu_custom_call.1} parent=11 // pred_fallthru
          _
        // Predicated region
        $region17: #{tpu_custom_call.1} parent=11 // pred_check
          %p146 = pneg %p81
        $region18: #{tpu_custom_call.1} parent=11 // pred_check_branch
          %148 = sbr.rel (%p146) target = $region20
        $region19: #{tpu_custom_call.1} parent=11 // pred_region
          _
        $region20: #{tpu_custom_call.1} parent=11 // pred_fallthru
          _
        // Predicated region
        $region21: #{tpu_custom_call.1} parent=11 // pred_check
          %p149 = pneg %p102
        $region22: #{tpu_custom_call.1} parent=11 // pred_check_branch
          %151 = sbr.rel (%p149) target = $region24
        $region23: #{tpu_custom_call.1} parent=11 // pred_region
          _
        $region24: #{tpu_custom_call.1} parent=11 // pred_fallthru
          _
      $region12: #{tpu_custom_call.1} parent=5 // pred_fallthru
        _
      %p152 = scmp.lt.s32.totalorder %s13, 16
      // Predicated region
      $region25: #{tpu_custom_call.1} parent=5 // pred_check
        %p153 = pneg %p152
      $region26: #{tpu_custom_call.1} parent=5 // pred_check_branch
        %155 = sbr.rel (%p153) target = $region28
      $region27: #{tpu_custom_call.1} parent=5 // pred_region
        // Predicated region
        $region29: #{tpu_custom_call.1} parent=27 // pred_check
          %p156 = pneg %p33
        $region30: #{tpu_custom_call.1} parent=27 // pred_check_branch
          %158 = sbr.rel (%p156) target = $region32
        $region31: #{tpu_custom_call.1} parent=27 // pred_region
          %s159 = smul.u32 64, %s13
          %p160 = scmp.lt.s32.totalorder %s159, 1023
          %s161 = scalar_select %p160, %s159, 1023
          %s162 = smul.addr %s161, 2
          %s163 = smul.addr %s162, 4
          %s164 = scalar_lea.vmem %s0, %s163
          %s165 = smul.u32 64, %s13
        $region32: #{tpu_custom_call.1} parent=27 // pred_fallthru
          _
      $region28: #{tpu_custom_call.1} parent=5 // pred_fallthru
        _
      %p166 = scmp.le.s32.totalorder 1, %s13
      %p167 = scmp.lt.s32.totalorder %s13, 17
      %p168 = pnand %p166, %p167
      %p169 = pneg %p168
      // Predicated region
      $region33: #{tpu_custom_call.1} parent=5 // pred_check
        _
      $region34: #{tpu_custom_call.1} parent=5 // pred_check_branch
        %171 = sbr.rel (%p168) target = $region36
      $region35: #{tpu_custom_call.1} parent=5 // pred_region
        %s172 = ssub.s32 %s13, 1
        %s173 = smul.u32 64, %s18
        %p174 = scmp.lt.s32.totalorder %s173, 1023
        %s175 = scalar_select %p174, %s173, 1023
        %s176 = smul.addr %s175, 2
        %s177 = smul.addr %s176, 4
        %s178 = scalar_lea.vmem %s0, %s177
        %p179 = pneg %p39
        %p180 = pneg %p36
        %p181 = pneg %p60
        %p182 = pneg %p57
        %p183 = pneg %p81
        %p184 = pneg %p78
        %p185 = pneg %p102
        %p186 = pneg %p99
        %p187 = pneg %p128
        %p188 = pneg %p125
        %s189 = sand.u32 %s115, 1
        %s190 = scalar_lea.sflag [#allocation3], %s189
        %s191 = sand.u32 %s115, 1
        %s192 = smul.addr %s191, 512
        %s193 = scalar_lea.vmem [#allocation2], %s192
        %s194 = smul.u32 64, %s18
        %p195 = scmp.lt.s32.totalorder %s194, 1023
        %s196 = scalar_select %p195, %s194, 1023
        %s197 = smul.addr %s196, 2
        %s198 = smul.addr %s197, 4
        %s199 = scalar_lea.vmem %s0, %s198
        %s200 = smul.u32 64, %s18
        %s201 = smul.u32 64, %s18
        %v203 = vld [vmem:[%s199] sm:$0xff]
        %v204 = vld [vmem:[%s199 + $0x8] sm:$0xff]
        %v205 = vld [vmem:[%s199 + $0x10] sm:$0xff]
        %v206 = vld [vmem:[%s199 + $0x18] sm:$0xff]
        %v207 = vld [vmem:[%s199 + $0x20] sm:$0xff]
        %v208 = vld [vmem:[%s199 + $0x28] sm:$0xff]
        %v209 = vld [vmem:[%s199 + $0x30] sm:$0xff]
        %v210 = vld [vmem:[%s199 + $0x38] sm:$0xff]
        %v211 = vld [vmem:[%s199 + $0x40] sm:$0xff]
        %v212 = vld [vmem:[%s199 + $0x48] sm:$0xff]
        %v213 = vld [vmem:[%s199 + $0x50] sm:$0xff]
        %v214 = vld [vmem:[%s199 + $0x58] sm:$0xff]
        %v215 = vld [vmem:[%s199 + $0x60] sm:$0xff]
        %v216 = vld [vmem:[%s199 + $0x68] sm:$0xff]
        %v217 = vld [vmem:[%s199 + $0x70] sm:$0xff]
        %v218 = vld [vmem:[%s199 + $0x78] sm:$0xff]
        %v219 = vld [vmem:[%s199 + $0x80] sm:$0xff]
        %v220 = vld [vmem:[%s199 + $0x88] sm:$0xff]
        %v221 = vld [vmem:[%s199 + $0x90] sm:$0xff]
        %v222 = vld [vmem:[%s199 + $0x98] sm:$0xff]
        %v223 = vld [vmem:[%s199 + $0xa0] sm:$0xff]
        %v224 = vld [vmem:[%s199 + $0xa8] sm:$0xff]
        %v225 = vld [vmem:[%s199 + $0xb0] sm:$0xff]
        %v226 = vld [vmem:[%s199 + $0xb8] sm:$0xff]
        %v227 = vld [vmem:[%s199 + $0xc0] sm:$0xff]
        %v228 = vld [vmem:[%s199 + $0xc8] sm:$0xff]
        %v229 = vld [vmem:[%s199 + $0xd0] sm:$0xff]
        %v230 = vld [vmem:[%s199 + $0xd8] sm:$0xff]
        %v231 = vld [vmem:[%s199 + $0xe0] sm:$0xff]
        %v232 = vld [vmem:[%s199 + $0xe8] sm:$0xff]
        %v233 = vld [vmem:[%s199 + $0xf0] sm:$0xff]
        %v234 = vld [vmem:[%s199 + $0xf8] sm:$0xff]
        %v235 = vld [vmem:[%s199 + $0x100] sm:$0xff]
        %v236 = vld [vmem:[%s199 + $0x108] sm:$0xff]
        %v237 = vld [vmem:[%s199 + $0x110] sm:$0xff]
        %v238 = vld [vmem:[%s199 + $0x118] sm:$0xff]
        %v239 = vld [vmem:[%s199 + $0x120] sm:$0xff]
        %v240 = vld [vmem:[%s199 + $0x128] sm:$0xff]
        %v241 = vld [vmem:[%s199 + $0x130] sm:$0xff]
        %v242 = vld [vmem:[%s199 + $0x138] sm:$0xff]
        %v243 = vld [vmem:[%s199 + $0x140] sm:$0xff]
        %v244 = vld [vmem:[%s199 + $0x148] sm:$0xff]
        %v245 = vld [vmem:[%s199 + $0x150] sm:$0xff]
        %v246 = vld [vmem:[%s199 + $0x158] sm:$0xff]
        %v247 = vld [vmem:[%s199 + $0x160] sm:$0xff]
        %v248 = vld [vmem:[%s199 + $0x168] sm:$0xff]
        %v249 = vld [vmem:[%s199 + $0x170] sm:$0xff]
        %v250 = vld [vmem:[%s199 + $0x178] sm:$0xff]
        %v251 = vld [vmem:[%s199 + $0x180] sm:$0xff]
        %v252 = vld [vmem:[%s199 + $0x188] sm:$0xff]
        %v253 = vld [vmem:[%s199 + $0x190] sm:$0xff]
        %v254 = vld [vmem:[%s199 + $0x198] sm:$0xff]
        %v255 = vld [vmem:[%s199 + $0x1a0] sm:$0xff]
        %v256 = vld [vmem:[%s199 + $0x1a8] sm:$0xff]
        %v257 = vld [vmem:[%s199 + $0x1b0] sm:$0xff]
        %v258 = vld [vmem:[%s199 + $0x1b8] sm:$0xff]
        %v259 = vld [vmem:[%s199 + $0x1c0] sm:$0xff]
        %v260 = vld [vmem:[%s199 + $0x1c8] sm:$0xff]
        %v261 = vld [vmem:[%s199 + $0x1d0] sm:$0xff]
        %v262 = vld [vmem:[%s199 + $0x1d8] sm:$0xff]
        %v263 = vld [vmem:[%s199 + $0x1e0] sm:$0xff]
        %v264 = vld [vmem:[%s199 + $0x1e8] sm:$0xff]
        %v265 = vld [vmem:[%s199 + $0x1f0] sm:$0xff]
        %v266 = vld [vmem:[%s199 + $0x1f8] sm:$0xff]
        %v267 = vld [vmem:[%s1] sm:$0xf]
        %v268 = vld [vmem:[%s1 + $0x4] sm:$0xf]
        %v269 = vld [vmem:[%s1 + $0x8] sm:$0xf]
        %v270 = vld [vmem:[%s1 + $0xc] sm:$0xf]
        %v271 = vld [vmem:[%s1 + $0x10] sm:$0xf]
        %v272 = vld [vmem:[%s1 + $0x14] sm:$0xf]
        %v273 = vld [vmem:[%s1 + $0x18] sm:$0xf]
        %v274 = vld [vmem:[%s1 + $0x1c] sm:$0xf]
        %v275 = vld [vmem:[%s1 + $0x20] sm:$0xf]
        %v276 = vld [vmem:[%s1 + $0x24] sm:$0xf]
        %v277 = vld [vmem:[%s1 + $0x28] sm:$0xf]
        %v278 = vld [vmem:[%s1 + $0x2c] sm:$0xf]
        %v279 = vld [vmem:[%s1 + $0x30] sm:$0xf]
        %v280 = vld [vmem:[%s1 + $0x34] sm:$0xf]
        %v281 = vld [vmem:[%s1 + $0x38] sm:$0xf]
        %v282 = vld [vmem:[%s1 + $0x3c] sm:$0xf]
        %v283 = vld [vmem:[%s1 + $0x40] sm:$0xf]
        %v284 = vld [vmem:[%s1 + $0x44] sm:$0xf]
        %v285 = vld [vmem:[%s1 + $0x48] sm:$0x3]
        %v350 = vunpack.c.l.b16 %v203
        %v351 = vunpack.c.h.b16 %v203
        %v352 = vunpack.c.l.b16 %v204
        %v353 = vunpack.c.h.b16 %v204
        %v354 = vunpack.c.l.b16 %v205
        %v355 = vunpack.c.h.b16 %v205
        %v356 = vunpack.c.l.b16 %v206
        %v357 = vunpack.c.h.b16 %v206
        %v358 = vunpack.c.l.b16 %v207
        %v359 = vunpack.c.h.b16 %v207
        %v360 = vunpack.c.l.b16 %v208
        %v361 = vunpack.c.h.b16 %v208
        %v362 = vunpack.c.l.b16 %v209
        %v363 = vunpack.c.h.b16 %v209
        %v364 = vunpack.c.l.b16 %v210
        %v365 = vunpack.c.h.b16 %v210
        %v366 = vunpack.c.l.b16 %v211
        %v367 = vunpack.c.h.b16 %v211
        %v368 = vunpack.c.l.b16 %v212
        %v369 = vunpack.c.h.b16 %v212
        %v370 = vunpack.c.l.b16 %v213
        %v371 = vunpack.c.h.b16 %v213
        %v372 = vunpack.c.l.b16 %v214
        %v373 = vunpack.c.h.b16 %v214
        %v374 = vunpack.c.l.b16 %v215
        %v375 = vunpack.c.h.b16 %v215
        %v376 = vunpack.c.l.b16 %v216
        %v377 = vunpack.c.h.b16 %v216
        %v378 = vunpack.c.l.b16 %v217
        %v379 = vunpack.c.h.b16 %v217
        %v380 = vunpack.c.l.b16 %v218
        %v381 = vunpack.c.h.b16 %v218
        %v382 = vunpack.c.l.b16 %v219
        %v383 = vunpack.c.h.b16 %v219
        %v384 = vunpack.c.l.b16 %v220
        %v385 = vunpack.c.h.b16 %v220
        %v386 = vunpack.c.l.b16 %v221
        %v387 = vunpack.c.h.b16 %v221
        %v388 = vunpack.c.l.b16 %v222
        %v389 = vunpack.c.h.b16 %v222
        %v390 = vunpack.c.l.b16 %v223
        %v391 = vunpack.c.h.b16 %v223
        %v392 = vunpack.c.l.b16 %v224
        %v393 = vunpack.c.h.b16 %v224
        %v394 = vunpack.c.l.b16 %v225
        %v395 = vunpack.c.h.b16 %v225
        %v396 = vunpack.c.l.b16 %v226
        %v397 = vunpack.c.h.b16 %v226
        %v398 = vunpack.c.l.b16 %v227
        %v399 = vunpack.c.h.b16 %v227
        %v400 = vunpack.c.l.b16 %v228
        %v401 = vunpack.c.h.b16 %v228
        %v402 = vunpack.c.l.b16 %v229
        %v403 = vunpack.c.h.b16 %v229
        %v404 = vunpack.c.l.b16 %v230
        %v405 = vunpack.c.h.b16 %v230
        %v406 = vunpack.c.l.b16 %v231
        %v407 = vunpack.c.h.b16 %v231
        %v408 = vunpack.c.l.b16 %v232
        %v409 = vunpack.c.h.b16 %v232
        %v410 = vunpack.c.l.b16 %v233
        %v411 = vunpack.c.h.b16 %v233
        %v412 = vunpack.c.l.b16 %v234
        %v413 = vunpack.c.h.b16 %v234
        %v414 = vunpack.c.l.b16 %v235
        %v415 = vunpack.c.h.b16 %v235
        %v416 = vunpack.c.l.b16 %v236
        %v417 = vunpack.c.h.b16 %v236
        %v418 = vunpack.c.l.b16 %v237
        %v419 = vunpack.c.h.b16 %v237
        %v420 = vunpack.c.l.b16 %v238
        %v421 = vunpack.c.h.b16 %v238
        %v422 = vunpack.c.l.b16 %v239
        %v423 = vunpack.c.h.b16 %v239
        %v424 = vunpack.c.l.b16 %v240
        %v425 = vunpack.c.h.b16 %v240
        %v426 = vunpack.c.l.b16 %v241
        %v427 = vunpack.c.h.b16 %v241
        %v428 = vunpack.c.l.b16 %v242
        %v429 = vunpack.c.h.b16 %v242
        %v430 = vunpack.c.l.b16 %v243
        %v431 = vunpack.c.h.b16 %v243
        %v432 = vunpack.c.l.b16 %v244
        %v433 = vunpack.c.h.b16 %v244
        %v434 = vunpack.c.l.b16 %v245
        %v435 = vunpack.c.h.b16 %v245
        %v436 = vunpack.c.l.b16 %v246
        %v437 = vunpack.c.h.b16 %v246
        %v438 = vunpack.c.l.b16 %v247
        %v439 = vunpack.c.h.b16 %v247
        %v440 = vunpack.c.l.b16 %v248
        %v441 = vunpack.c.h.b16 %v248
        %v442 = vunpack.c.l.b16 %v249
        %v443 = vunpack.c.h.b16 %v249
        %v444 = vunpack.c.l.b16 %v250
        %v445 = vunpack.c.h.b16 %v250
        %v446 = vunpack.c.l.b16 %v251
        %v447 = vunpack.c.h.b16 %v251
        %v448 = vunpack.c.l.b16 %v252
        %v449 = vunpack.c.h.b16 %v252
        %v450 = vunpack.c.l.b16 %v253
        %v451 = vunpack.c.h.b16 %v253
        %v452 = vunpack.c.l.b16 %v254
        %v453 = vunpack.c.h.b16 %v254
        %v454 = vunpack.c.l.b16 %v255
        %v455 = vunpack.c.h.b16 %v255
        %v456 = vunpack.c.l.b16 %v256
        %v457 = vunpack.c.h.b16 %v256
        %v458 = vunpack.c.l.b16 %v257
        %v459 = vunpack.c.h.b16 %v257
        %v460 = vunpack.c.l.b16 %v258
        %v461 = vunpack.c.h.b16 %v258
        %v462 = vunpack.c.l.b16 %v259
        %v463 = vunpack.c.h.b16 %v259
        %v464 = vunpack.c.l.b16 %v260
        %v465 = vunpack.c.h.b16 %v260
        %v466 = vunpack.c.l.b16 %v261
        %v467 = vunpack.c.h.b16 %v261
        %v468 = vunpack.c.l.b16 %v262
        %v469 = vunpack.c.h.b16 %v262
        %v470 = vunpack.c.l.b16 %v263
        %v471 = vunpack.c.h.b16 %v263
        %v472 = vunpack.c.l.b16 %v264
        %v473 = vunpack.c.h.b16 %v264
        %v474 = vunpack.c.l.b16 %v265
        %v475 = vunpack.c.h.b16 %v265
        %v476 = vunpack.c.l.b16 %v266
        %v477 = vunpack.c.h.b16 %v266
        %v478 = vpack.c.b16 %v352, %v350
        %v479 = vpack.c.b16 %v353, %v351
        %v480 = vpack.c.b16 %v356, %v354
        %v481 = vpack.c.b16 %v357, %v355
        %v482 = vpack.c.b16 %v360, %v358
        %v483 = vpack.c.b16 %v361, %v359
        %v484 = vpack.c.b16 %v364, %v362
        %v485 = vpack.c.b16 %v365, %v363
        %v486 = vpack.c.b16 %v368, %v366
        %v487 = vpack.c.b16 %v369, %v367
        %v488 = vpack.c.b16 %v372, %v370
        %v489 = vpack.c.b16 %v373, %v371
        %v490 = vpack.c.b16 %v376, %v374
        %v491 = vpack.c.b16 %v377, %v375
        %v492 = vpack.c.b16 %v380, %v378
        %v493 = vpack.c.b16 %v381, %v379
        %v494 = vpack.c.b16 %v384, %v382
        %v495 = vpack.c.b16 %v385, %v383
        %v496 = vpack.c.b16 %v388, %v386
        %v497 = vpack.c.b16 %v389, %v387
        %v498 = vpack.c.b16 %v392, %v390
        %v499 = vpack.c.b16 %v393, %v391
        %v500 = vpack.c.b16 %v396, %v394
        %v501 = vpack.c.b16 %v397, %v395
        %v502 = vpack.c.b16 %v400, %v398
        %v503 = vpack.c.b16 %v401, %v399
        %v504 = vpack.c.b16 %v404, %v402
        %v505 = vpack.c.b16 %v405, %v403
        %v506 = vpack.c.b16 %v408, %v406
        %v507 = vpack.c.b16 %v409, %v407
        %v508 = vpack.c.b16 %v412, %v410
        %v509 = vpack.c.b16 %v413, %v411
        %v510 = vpack.c.b16 %v416, %v414
        %v511 = vpack.c.b16 %v417, %v415
        %v512 = vpack.c.b16 %v420, %v418
        %v513 = vpack.c.b16 %v421, %v419
        %v514 = vpack.c.b16 %v424, %v422
        %v515 = vpack.c.b16 %v425, %v423
        %v516 = vpack.c.b16 %v428, %v426
        %v517 = vpack.c.b16 %v429, %v427
        %v518 = vpack.c.b16 %v432, %v430
        %v519 = vpack.c.b16 %v433, %v431
        %v520 = vpack.c.b16 %v436, %v434
        %v521 = vpack.c.b16 %v437, %v435
        %v522 = vpack.c.b16 %v440, %v438
        %v523 = vpack.c.b16 %v441, %v439
        %v524 = vpack.c.b16 %v444, %v442
        %v525 = vpack.c.b16 %v445, %v443
        %v526 = vpack.c.b16 %v448, %v446
        %v527 = vpack.c.b16 %v449, %v447
        %v528 = vpack.c.b16 %v452, %v450
        %v529 = vpack.c.b16 %v453, %v451
        %v530 = vpack.c.b16 %v456, %v454
        %v531 = vpack.c.b16 %v457, %v455
        %v532 = vpack.c.b16 %v460, %v458
        %v533 = vpack.c.b16 %v461, %v459
        %v534 = vpack.c.b16 %v464, %v462
        %v535 = vpack.c.b16 %v465, %v463
        %v536 = vpack.c.b16 %v468, %v466
        %v537 = vpack.c.b16 %v469, %v467
        %v538 = vpack.c.b16 %v472, %v470
        %v539 = vpack.c.b16 %v473, %v471
        %v540 = vpack.c.b16 %v476, %v474
        %v541 = vpack.c.b16 %v477, %v475
        %v593 = vunpack.c.l.b16 %v267
        %v594 = vunpack.c.l.b16 %v268
        %v595 = vunpack.c.l.b16 %v269
        %v596 = vunpack.c.l.b16 %v270
        %v597 = vunpack.c.l.b16 %v271
        %v598 = vunpack.c.l.b16 %v272
        %v599 = vunpack.c.l.b16 %v273
        %v600 = vunpack.c.l.b16 %v274
        %v601 = vunpack.c.l.b16 %v275
        %v602 = vunpack.c.l.b16 %v276
        %v603 = vunpack.c.l.b16 %v277
        %v604 = vunpack.c.l.b16 %v278
        %v605 = vunpack.c.l.b16 %v279
        %v606 = vunpack.c.l.b16 %v280
        %v607 = vunpack.c.l.b16 %v281
        %v608 = vunpack.c.l.b16 %v282
        %v609 = vunpack.c.l.b16 %v283
        %v610 = vunpack.c.l.b16 %v284
        %v611 = vunpack.c.l.b16 %v285
        %v612 = vpack.c.b16 %v594, %v593
        %v613 = vpack.c.b16 %v596, %v595
        %v614 = vpack.c.b16 %v598, %v597
        %v615 = vpack.c.b16 %v600, %v599
        %v616 = vpack.c.b16 %v602, %v601
        %v617 = vpack.c.b16 %v604, %v603
        %v618 = vpack.c.b16 %v606, %v605
        %v619 = vpack.c.b16 %v608, %v607
        %v620 = vpack.c.b16 %v610, %v609
        %v621 = vpack.c.b16 %v611, %v611
        %vm631 = vcmask 154624
        %v633 = vsel %vm631, %v479, 0
        %v636 = vsel %vm631, %v481, 0
        %v639 = vsel %vm631, %v483, 0
        %v642 = vsel %vm631, %v485, 0
        %v645 = vsel %vm631, %v487, 0
        %v648 = vsel %vm631, %v489, 0
        %v651 = vsel %vm631, %v491, 0
        %v654 = vsel %vm631, %v493, 0
        %v657 = vsel %vm631, %v495, 0
        %v660 = vsel %vm631, %v497, 0
        %v663 = vsel %vm631, %v499, 0
        %v666 = vsel %vm631, %v501, 0
        %v669 = vsel %vm631, %v503, 0
        %v672 = vsel %vm631, %v505, 0
        %v675 = vsel %vm631, %v507, 0
        %v678 = vsel %vm631, %v509, 0
        %v681 = vsel %vm631, %v511, 0
        %v684 = vsel %vm631, %v513, 0
        %v687 = vsel %vm631, %v515, 0
        %v690 = vsel %vm631, %v517, 0
        %v693 = vsel %vm631, %v519, 0
        %v696 = vsel %vm631, %v521, 0
        %v699 = vsel %vm631, %v523, 0
        %v702 = vsel %vm631, %v525, 0
        %v705 = vsel %vm631, %v527, 0
        %v708 = vsel %vm631, %v529, 0
        %v711 = vsel %vm631, %v531, 0
        %v714 = vsel %vm631, %v533, 0
        %v717 = vsel %vm631, %v535, 0
        %v720 = vsel %vm631, %v537, 0
        %v723 = vsel %vm631, %v539, 0
        %v726 = vsel %vm631, %v541, 0
        %vm728 = vcmask 1040384
        %vm729 = vcmask 1041408
        %v730 = vsel %vm728, 4294967295, 65535
        %v731 = vsel %vm729, %v730, 0
        %v733 = vand.u32 %v621, %v731
        %735 = vmatprep.subr.bf16.mxu0 0
        %736 = vmatpush1.bf16.msra.mxu0 %v619
        %737 = vmatprep.subr.bf16.mxu0 0
        %738 = vmatpush1.bf16.msra.mxu0 %v618
        %739 = vmatprep.subr.bf16.mxu0 0
        %740 = vmatpush1.bf16.msra.mxu0 %v617
        %741 = vmatprep.subr.bf16.mxu0 0
        %742 = vmatpush1.bf16.msra.mxu0 %v616
        %743 = vmatprep.subr.bf16.mxu0 0
        %744 = vmatpush1.bf16.msra.mxu0 %v615
        %745 = vmatprep.subr.bf16.mxu0 0
        %746 = vmatpush1.bf16.msra.mxu0 %v614
        %747 = vmatprep.subr.bf16.mxu0 0
        %748 = vmatpush1.bf16.msra.mxu0 %v613
        %749 = vmatprep.subr.bf16.mxu0 0
        %750 = vmatpush1.bf16.msra.mxu0 %v612
        %751 = vmatprep.subr.bf16.mxu0 0
        %752 = vmatpush2.bf16.msra.mxu0 0
        %753 = vmatprep.subr.bf16.mxu0 0
        %754 = vmatpush2.bf16.msra.mxu0 0
        %755 = vmatprep.subr.bf16.mxu0 0
        %756 = vmatpush2.bf16.msra.mxu0 0
        %757 = vmatprep.subr.bf16.mxu0 0
        %758 = vmatpush2.bf16.msra.mxu0 0
        %759 = vmatprep.subr.bf16.mxu0 0
        %760 = vmatpush2.bf16.msra.mxu0 0
        %761 = vmatprep.subr.bf16.mxu0 0
        %762 = vmatpush2.bf16.msra.mxu0 0
        %763 = vmatprep.subr.bf16.mxu0 0
        %764 = vmatpush2.bf16.msra.mxu0 %v733
        %765 = vmatprep.subr.bf16.mxu0 0
        %766 = vmatpush2.bf16.msra.mxu0 %v620
        %767 = vmatprep.mubr.bf16.mxu0 %v633
        %768 = vmatmul.mubr.bf16.gmra.mxu0 %v478
        %v769 = vpop.f32.mrf.mxu0
        %v770 = vadd.f32 0.0, %v769
        %v771 = vpop.f32.mrf.mxu0
        %v772 = vpop.f32.mrf.mxu0
        %v773 = vadd.f32 0.0, %v772
        %v774 = vpop.f32.mrf.mxu0
        %775 = vmatprep.mubr.bf16.mxu0 %v636
        %776 = vmatmul.mubr.bf16.gmra.mxu0 %v480
        %v777 = vpop.f32.mrf.mxu0
        %v778 = vadd.f32 0.0, %v777
        %v779 = vpop.f32.mrf.mxu0
        %v780 = vpop.f32.mrf.mxu0
        %v781 = vadd.f32 0.0, %v780
        %v782 = vpop.f32.mrf.mxu0
        %783 = vmatprep.mubr.bf16.mxu0 %v639
        %784 = vmatmul.mubr.bf16.gmra.mxu0 %v482
        %v785 = vpop.f32.mrf.mxu0
        %v786 = vadd.f32 0.0, %v785
        %v787 = vpop.f32.mrf.mxu0
        %v788 = vpop.f32.mrf.mxu0
        %v789 = vadd.f32 0.0, %v788
        %v790 = vpop.f32.mrf.mxu0
        %791 = vmatprep.mubr.bf16.mxu0 %v642
        %792 = vmatmul.mubr.bf16.gmra.mxu0 %v484
        %v793 = vpop.f32.mrf.mxu0
        %v794 = vadd.f32 0.0, %v793
        %v795 = vpop.f32.mrf.mxu0
        %v796 = vpop.f32.mrf.mxu0
        %v797 = vadd.f32 0.0, %v796
        %v798 = vpop.f32.mrf.mxu0
        %799 = vmatprep.mubr.bf16.mxu0 %v645
        %800 = vmatmul.mubr.bf16.gmra.mxu0 %v486
        %v801 = vpop.f32.mrf.mxu0
        %v802 = vadd.f32 0.0, %v801
        %v803 = vpop.f32.mrf.mxu0
        %v804 = vpop.f32.mrf.mxu0
        %v805 = vadd.f32 0.0, %v804
        %v806 = vpop.f32.mrf.mxu0
        %807 = vmatprep.mubr.bf16.mxu0 %v648
        %808 = vmatmul.mubr.bf16.gmra.mxu0 %v488
        %v809 = vpop.f32.mrf.mxu0
        %v810 = vadd.f32 0.0, %v809
        %v811 = vpop.f32.mrf.mxu0
        %v812 = vpop.f32.mrf.mxu0
        %v813 = vadd.f32 0.0, %v812
        %v814 = vpop.f32.mrf.mxu0
        %815 = vmatprep.mubr.bf16.mxu0 %v651
        %816 = vmatmul.mubr.bf16.gmra.mxu0 %v490
        %v817 = vpop.f32.mrf.mxu0
        %v818 = vadd.f32 0.0, %v817
        %v819 = vpop.f32.mrf.mxu0
        %v820 = vpop.f32.mrf.mxu0
        %v821 = vadd.f32 0.0, %v820
        %v822 = vpop.f32.mrf.mxu0
        %823 = vmatprep.mubr.bf16.mxu0 %v654
        %824 = vmatmul.mubr.bf16.gmra.mxu0 %v492
        %v825 = vpop.f32.mrf.mxu0
        %v826 = vadd.f32 0.0, %v825
        %v827 = vpop.f32.mrf.mxu0
        %v828 = vpop.f32.mrf.mxu0
        %v829 = vadd.f32 0.0, %v828
        %v830 = vpop.f32.mrf.mxu0
        %831 = vmatprep.mubr.bf16.mxu0 %v657
        %832 = vmatmul.mubr.bf16.gmra.mxu0 %v494
        %v833 = vpop.f32.mrf.mxu0
        %v834 = vadd.f32 0.0, %v833
        %v835 = vpop.f32.mrf.mxu0
        %v836 = vpop.f32.mrf.mxu0
        %v837 = vadd.f32 0.0, %v836
        %v838 = vpop.f32.mrf.mxu0
        %839 = vmatprep.mubr.bf16.mxu0 %v660
        %840 = vmatmul.mubr.bf16.gmra.mxu0 %v496
        %v841 = vpop.f32.mrf.mxu0
        %v842 = vadd.f32 0.0, %v841
        %v843 = vpop.f32.mrf.mxu0
        %v844 = vpop.f32.mrf.mxu0
        %v845 = vadd.f32 0.0, %v844
        %v846 = vpop.f32.mrf.mxu0
        %847 = vmatprep.mubr.bf16.mxu0 %v663
        %848 = vmatmul.mubr.bf16.gmra.mxu0 %v498
        %v849 = vpop.f32.mrf.mxu0
        %v850 = vadd.f32 0.0, %v849
        %v851 = vpop.f32.mrf.mxu0
        %v852 = vpop.f32.mrf.mxu0
        %v853 = vadd.f32 0.0, %v852
        %v854 = vpop.f32.mrf.mxu0
        %855 = vmatprep.mubr.bf16.mxu0 %v666
        %856 = vmatmul.mubr.bf16.gmra.mxu0 %v500
        %v857 = vpop.f32.mrf.mxu0
        %v858 = vadd.f32 0.0, %v857
        %v859 = vpop.f32.mrf.mxu0
        %v860 = vpop.f32.mrf.mxu0
        %v861 = vadd.f32 0.0, %v860
        %v862 = vpop.f32.mrf.mxu0
        %863 = vmatprep.mubr.bf16.mxu0 %v669
        %864 = vmatmul.mubr.bf16.gmra.mxu0 %v502
        %v865 = vpop.f32.mrf.mxu0
        %v866 = vadd.f32 0.0, %v865
        %v867 = vpop.f32.mrf.mxu0
        %v868 = vpop.f32.mrf.mxu0
        %v869 = vadd.f32 0.0, %v868
        %v870 = vpop.f32.mrf.mxu0
        %871 = vmatprep.mubr.bf16.mxu0 %v672
        %872 = vmatmul.mubr.bf16.gmra.mxu0 %v504
        %v873 = vpop.f32.mrf.mxu0
        %v874 = vadd.f32 0.0, %v873
        %v875 = vpop.f32.mrf.mxu0
        %v876 = vpop.f32.mrf.mxu0
        %v877 = vadd.f32 0.0, %v876
        %v878 = vpop.f32.mrf.mxu0
        %879 = vmatprep.mubr.bf16.mxu0 %v675
        %880 = vmatmul.mubr.bf16.gmra.mxu0 %v506
        %v881 = vpop.f32.mrf.mxu0
        %v882 = vadd.f32 0.0, %v881
        %v883 = vpop.f32.mrf.mxu0
        %v884 = vpop.f32.mrf.mxu0
        %v885 = vadd.f32 0.0, %v884
        %v886 = vpop.f32.mrf.mxu0
        %887 = vmatprep.mubr.bf16.mxu0 %v678
        %888 = vmatmul.mubr.bf16.gmra.mxu0 %v508
        %v889 = vpop.f32.mrf.mxu0
        %v890 = vadd.f32 0.0, %v889
        %v891 = vpop.f32.mrf.mxu0
        %v892 = vpop.f32.mrf.mxu0
        %v893 = vadd.f32 0.0, %v892
        %v894 = vpop.f32.mrf.mxu0
        %895 = vmatprep.mubr.bf16.mxu0 %v681
        %896 = vmatmul.mubr.bf16.gmra.mxu0 %v510
        %v897 = vpop.f32.mrf.mxu0
        %v898 = vadd.f32 0.0, %v897
        %v899 = vpop.f32.mrf.mxu0
        %v900 = vpop.f32.mrf.mxu0
        %v901 = vadd.f32 0.0, %v900
        %v902 = vpop.f32.mrf.mxu0
        %903 = vmatprep.mubr.bf16.mxu0 %v684
        %904 = vmatmul.mubr.bf16.gmra.mxu0 %v512
        %v905 = vpop.f32.mrf.mxu0
        %v906 = vadd.f32 0.0, %v905
        %v907 = vpop.f32.mrf.mxu0
        %v908 = vpop.f32.mrf.mxu0
        %v909 = vadd.f32 0.0, %v908
        %v910 = vpop.f32.mrf.mxu0
        %911 = vmatprep.mubr.bf16.mxu0 %v687
        %912 = vmatmul.mubr.bf16.gmra.mxu0 %v514
        %v913 = vpop.f32.mrf.mxu0
        %v914 = vadd.f32 0.0, %v913
        %v915 = vpop.f32.mrf.mxu0
        %v916 = vpop.f32.mrf.mxu0
        %v917 = vadd.f32 0.0, %v916
        %v918 = vpop.f32.mrf.mxu0
        %919 = vmatprep.mubr.bf16.mxu0 %v690
        %920 = vmatmul.mubr.bf16.gmra.mxu0 %v516
        %v921 = vpop.f32.mrf.mxu0
        %v922 = vadd.f32 0.0, %v921
        %v923 = vpop.f32.mrf.mxu0
        %v924 = vpop.f32.mrf.mxu0
        %v925 = vadd.f32 0.0, %v924
        %v926 = vpop.f32.mrf.mxu0
        %927 = vmatprep.mubr.bf16.mxu0 %v693
        %928 = vmatmul.mubr.bf16.gmra.mxu0 %v518
        %v929 = vpop.f32.mrf.mxu0
        %v930 = vadd.f32 0.0, %v929
        %v931 = vpop.f32.mrf.mxu0
        %v932 = vpop.f32.mrf.mxu0
        %v933 = vadd.f32 0.0, %v932
        %v934 = vpop.f32.mrf.mxu0
        %935 = vmatprep.mubr.bf16.mxu0 %v696
        %936 = vmatmul.mubr.bf16.gmra.mxu0 %v520
        %v937 = vpop.f32.mrf.mxu0
        %v938 = vadd.f32 0.0, %v937
        %v939 = vpop.f32.mrf.mxu0
        %v940 = vpop.f32.mrf.mxu0
        %v941 = vadd.f32 0.0, %v940
        %v942 = vpop.f32.mrf.mxu0
        %943 = vmatprep.mubr.bf16.mxu0 %v699
        %944 = vmatmul.mubr.bf16.gmra.mxu0 %v522
        %v945 = vpop.f32.mrf.mxu0
        %v946 = vadd.f32 0.0, %v945
        %v947 = vpop.f32.mrf.mxu0
        %v948 = vpop.f32.mrf.mxu0
        %v949 = vadd.f32 0.0, %v948
        %v950 = vpop.f32.mrf.mxu0
        %951 = vmatprep.mubr.bf16.mxu0 %v702
        %952 = vmatmul.mubr.bf16.gmra.mxu0 %v524
        %v953 = vpop.f32.mrf.mxu0
        %v954 = vadd.f32 0.0, %v953
        %v955 = vpop.f32.mrf.mxu0
        %v956 = vpop.f32.mrf.mxu0
        %v957 = vadd.f32 0.0, %v956
        %v958 = vpop.f32.mrf.mxu0
        %959 = vmatprep.mubr.bf16.mxu0 %v705
        %960 = vmatmul.mubr.bf16.gmra.mxu0 %v526
        %v961 = vpop.f32.mrf.mxu0
        %v962 = vadd.f32 0.0, %v961
        %v963 = vpop.f32.mrf.mxu0
        %v964 = vpop.f32.mrf.mxu0
        %v965 = vadd.f32 0.0, %v964
        %v966 = vpop.f32.mrf.mxu0
        %967 = vmatprep.mubr.bf16.mxu0 %v708
        %968 = vmatmul.mubr.bf16.gmra.mxu0 %v528
        %v969 = vpop.f32.mrf.mxu0
        %v970 = vadd.f32 0.0, %v969
        %v971 = vpop.f32.mrf.mxu0
        %v972 = vpop.f32.mrf.mxu0
        %v973 = vadd.f32 0.0, %v972
        %v974 = vpop.f32.mrf.mxu0
        %975 = vmatprep.mubr.bf16.mxu0 %v711
        %976 = vmatmul.mubr.bf16.gmra.mxu0 %v530
        %v977 = vpop.f32.mrf.mxu0
        %v978 = vadd.f32 0.0, %v977
        %v979 = vpop.f32.mrf.mxu0
        %v980 = vpop.f32.mrf.mxu0
        %v981 = vadd.f32 0.0, %v980
        %v982 = vpop.f32.mrf.mxu0
        %983 = vmatprep.mubr.bf16.mxu0 %v714
        %984 = vmatmul.mubr.bf16.gmra.mxu0 %v532
        %v985 = vpop.f32.mrf.mxu0
        %v986 = vadd.f32 0.0, %v985
        %v987 = vpop.f32.mrf.mxu0
        %v988 = vpop.f32.mrf.mxu0
        %v989 = vadd.f32 0.0, %v988
        %v990 = vpop.f32.mrf.mxu0
        %991 = vmatprep.mubr.bf16.mxu0 %v717
        %992 = vmatmul.mubr.bf16.gmra.mxu0 %v534
        %v993 = vpop.f32.mrf.mxu0
        %v994 = vadd.f32 0.0, %v993
        %v995 = vpop.f32.mrf.mxu0
        %v996 = vpop.f32.mrf.mxu0
        %v997 = vadd.f32 0.0, %v996
        %v998 = vpop.f32.mrf.mxu0
        %999 = vmatprep.mubr.bf16.mxu0 %v720
        %1000 = vmatmul.mubr.bf16.gmra.mxu0 %v536
        %v1001 = vpop.f32.mrf.mxu0
        %v1002 = vadd.f32 0.0, %v1001
        %v1003 = vpop.f32.mrf.mxu0
        %v1004 = vpop.f32.mrf.mxu0
        %v1005 = vadd.f32 0.0, %v1004
        %v1006 = vpop.f32.mrf.mxu0
        %1007 = vmatprep.mubr.bf16.mxu0 %v723
        %1008 = vmatmul.mubr.bf16.gmra.mxu0 %v538
        %v1009 = vpop.f32.mrf.mxu0
        %v1010 = vadd.f32 0.0, %v1009
        %v1011 = vpop.f32.mrf.mxu0
        %v1012 = vpop.f32.mrf.mxu0
        %v1013 = vadd.f32 0.0, %v1012
        %v1014 = vpop.f32.mrf.mxu0
        %1015 = vmatprep.mubr.bf16.mxu0 %v726
        %1016 = vmatmul.mubr.bf16.gmra.mxu0 %v540
        %v1017 = vpop.f32.mrf.mxu0
        %v1018 = vadd.f32 0.0, %v1017
        %v1019 = vpop.f32.mrf.mxu0
        %v1020 = vpop.f32.mrf.mxu0
        %v1021 = vadd.f32 0.0, %v1020
        %v1022 = vpop.f32.mrf.mxu0
        %1023 = vdwg.mxu0
        %v1024 = vld [vmem:[%s2] sm:$0x1]
        %v1026 = vlaneseq
        %v1027 = vshrl.u32 %v1026, 7
        %v1028 = vsub.s32 0, %v1027
        %v1029 = vrot.slane %v1024, %v1028
        %v1031 = vmul.f32 %v770, %v1029
        %v1032 = vmul.f32 %v773, %v1029
        %v1033 = vmul.f32 %v778, %v1029
        %v1034 = vmul.f32 %v781, %v1029
        %v1035 = vmul.f32 %v786, %v1029
        %v1036 = vmul.f32 %v789, %v1029
        %v1037 = vmul.f32 %v794, %v1029
        %v1038 = vmul.f32 %v797, %v1029
        %v1039 = vmul.f32 %v802, %v1029
        %v1040 = vmul.f32 %v805, %v1029
        %v1041 = vmul.f32 %v810, %v1029
        %v1042 = vmul.f32 %v813, %v1029
        %v1043 = vmul.f32 %v818, %v1029
        %v1044 = vmul.f32 %v821, %v1029
        %v1045 = vmul.f32 %v826, %v1029
        %v1046 = vmul.f32 %v829, %v1029
        %v1047 = vmul.f32 %v834, %v1029
        %v1048 = vmul.f32 %v837, %v1029
        %v1049 = vmul.f32 %v842, %v1029
        %v1050 = vmul.f32 %v845, %v1029
        %v1051 = vmul.f32 %v850, %v1029
        %v1052 = vmul.f32 %v853, %v1029
        %v1053 = vmul.f32 %v858, %v1029
        %v1054 = vmul.f32 %v861, %v1029
        %v1055 = vmul.f32 %v866, %v1029
        %v1056 = vmul.f32 %v869, %v1029
        %v1057 = vmul.f32 %v874, %v1029
        %v1058 = vmul.f32 %v877, %v1029
        %v1059 = vmul.f32 %v882, %v1029
        %v1060 = vmul.f32 %v885, %v1029
        %v1061 = vmul.f32 %v890, %v1029
        %v1062 = vmul.f32 %v893, %v1029
        %v1063 = vmul.f32 %v898, %v1029
        %v1064 = vmul.f32 %v901, %v1029
        %v1065 = vmul.f32 %v906, %v1029
        %v1066 = vmul.f32 %v909, %v1029
        %v1067 = vmul.f32 %v914, %v1029
        %v1068 = vmul.f32 %v917, %v1029
        %v1069 = vmul.f32 %v922, %v1029
        %v1070 = vmul.f32 %v925, %v1029
        %v1071 = vmul.f32 %v930, %v1029
        %v1072 = vmul.f32 %v933, %v1029
        %v1073 = vmul.f32 %v938, %v1029
        %v1074 = vmul.f32 %v941, %v1029
        %v1075 = vmul.f32 %v946, %v1029
        %v1076 = vmul.f32 %v949, %v1029
        %v1077 = vmul.f32 %v954, %v1029
        %v1078 = vmul.f32 %v957, %v1029
        %v1079 = vmul.f32 %v962, %v1029
        %v1080 = vmul.f32 %v965, %v1029
        %v1081 = vmul.f32 %v970, %v1029
        %v1082 = vmul.f32 %v973, %v1029
        %v1083 = vmul.f32 %v978, %v1029
        %v1084 = vmul.f32 %v981, %v1029
        %v1085 = vmul.f32 %v986, %v1029
        %v1086 = vmul.f32 %v989, %v1029
        %v1087 = vmul.f32 %v994, %v1029
        %v1088 = vmul.f32 %v997, %v1029
        %v1089 = vmul.f32 %v1002, %v1029
        %v1090 = vmul.f32 %v1005, %v1029
        %v1091 = vmul.f32 %v1010, %v1029
        %v1092 = vmul.f32 %v1013, %v1029
        %v1093 = vmul.f32 %v1018, %v1029
        %v1094 = vmul.f32 %v1021, %v1029
        %v1095 = vld [vmem:[%s3] sm:$0x1]
        %v1097 = vlaneseq
        %v1098 = vshrl.u32 %v1097, 7
        %v1099 = vsub.s32 0, %v1098
        %v1100 = vrot.slane %v1095, %v1099
        %v1102 = vadd.f32 %v1031, %v1100
        %v1103 = vadd.f32 %v1032, %v1100
        %v1104 = vadd.f32 %v1033, %v1100
        %v1105 = vadd.f32 %v1034, %v1100
        %v1106 = vadd.f32 %v1035, %v1100
        %v1107 = vadd.f32 %v1036, %v1100
        %v1108 = vadd.f32 %v1037, %v1100
        %v1109 = vadd.f32 %v1038, %v1100
        %v1110 = vadd.f32 %v1039, %v1100
        %v1111 = vadd.f32 %v1040, %v1100
        %v1112 = vadd.f32 %v1041, %v1100
        %v1113 = vadd.f32 %v1042, %v1100
        %v1114 = vadd.f32 %v1043, %v1100
        %v1115 = vadd.f32 %v1044, %v1100
        %v1116 = vadd.f32 %v1045, %v1100
        %v1117 = vadd.f32 %v1046, %v1100
        %v1118 = vadd.f32 %v1047, %v1100
        %v1119 = vadd.f32 %v1048, %v1100
        %v1120 = vadd.f32 %v1049, %v1100
        %v1121 = vadd.f32 %v1050, %v1100
        %v1122 = vadd.f32 %v1051, %v1100
        %v1123 = vadd.f32 %v1052, %v1100
        %v1124 = vadd.f32 %v1053, %v1100
        %v1125 = vadd.f32 %v1054, %v1100
        %v1126 = vadd.f32 %v1055, %v1100
        %v1127 = vadd.f32 %v1056, %v1100
        %v1128 = vadd.f32 %v1057, %v1100
        %v1129 = vadd.f32 %v1058, %v1100
        %v1130 = vadd.f32 %v1059, %v1100
        %v1131 = vadd.f32 %v1060, %v1100
        %v1132 = vadd.f32 %v1061, %v1100
        %v1133 = vadd.f32 %v1062, %v1100
        %v1134 = vadd.f32 %v1063, %v1100
        %v1135 = vadd.f32 %v1064, %v1100
        %v1136 = vadd.f32 %v1065, %v1100
        %v1137 = vadd.f32 %v1066, %v1100
        %v1138 = vadd.f32 %v1067, %v1100
        %v1139 = vadd.f32 %v1068, %v1100
        %v1140 = vadd.f32 %v1069, %v1100
        %v1141 = vadd.f32 %v1070, %v1100
        %v1142 = vadd.f32 %v1071, %v1100
        %v1143 = vadd.f32 %v1072, %v1100
        %v1144 = vadd.f32 %v1073, %v1100
        %v1145 = vadd.f32 %v1074, %v1100
        %v1146 = vadd.f32 %v1075, %v1100
        %v1147 = vadd.f32 %v1076, %v1100
        %v1148 = vadd.f32 %v1077, %v1100
        %v1149 = vadd.f32 %v1078, %v1100
        %v1150 = vadd.f32 %v1079, %v1100
        %v1151 = vadd.f32 %v1080, %v1100
        %v1152 = vadd.f32 %v1081, %v1100
        %v1153 = vadd.f32 %v1082, %v1100
        %v1154 = vadd.f32 %v1083, %v1100
        %v1155 = vadd.f32 %v1084, %v1100
        %v1156 = vadd.f32 %v1085, %v1100
        %v1157 = vadd.f32 %v1086, %v1100
        %v1158 = vadd.f32 %v1087, %v1100
        %v1159 = vadd.f32 %v1088, %v1100
        %v1160 = vadd.f32 %v1089, %v1100
        %v1161 = vadd.f32 %v1090, %v1100
        %v1162 = vadd.f32 %v1091, %v1100
        %v1163 = vadd.f32 %v1092, %v1100
        %v1164 = vadd.f32 %v1093, %v1100
        %v1165 = vadd.f32 %v1094, %v1100
        %v1166 = vmax.f32 %v1102, 0.0
        %v1167 = vmax.f32 %v1103, 0.0
        %v1168 = vmax.f32 %v1104, 0.0
        %v1169 = vmax.f32 %v1105, 0.0
        %v1170 = vmax.f32 %v1106, 0.0
        %v1171 = vmax.f32 %v1107, 0.0
        %v1172 = vmax.f32 %v1108, 0.0
        %v1173 = vmax.f32 %v1109, 0.0
        %v1174 = vmax.f32 %v1110, 0.0
        %v1175 = vmax.f32 %v1111, 0.0
        %v1176 = vmax.f32 %v1112, 0.0
        %v1177 = vmax.f32 %v1113, 0.0
        %v1178 = vmax.f32 %v1114, 0.0
        %v1179 = vmax.f32 %v1115, 0.0
        %v1180 = vmax.f32 %v1116, 0.0
        %v1181 = vmax.f32 %v1117, 0.0
        %v1182 = vmax.f32 %v1118, 0.0
        %v1183 = vmax.f32 %v1119, 0.0
        %v1184 = vmax.f32 %v1120, 0.0
        %v1185 = vmax.f32 %v1121, 0.0
        %v1186 = vmax.f32 %v1122, 0.0
        %v1187 = vmax.f32 %v1123, 0.0
        %v1188 = vmax.f32 %v1124, 0.0
        %v1189 = vmax.f32 %v1125, 0.0
        %v1190 = vmax.f32 %v1126, 0.0
        %v1191 = vmax.f32 %v1127, 0.0
        %v1192 = vmax.f32 %v1128, 0.0
        %v1193 = vmax.f32 %v1129, 0.0
        %v1194 = vmax.f32 %v1130, 0.0
        %v1195 = vmax.f32 %v1131, 0.0
        %v1196 = vmax.f32 %v1132, 0.0
        %v1197 = vmax.f32 %v1133, 0.0
        %v1198 = vmax.f32 %v1134, 0.0
        %v1199 = vmax.f32 %v1135, 0.0
        %v1200 = vmax.f32 %v1136, 0.0
        %v1201 = vmax.f32 %v1137, 0.0
        %v1202 = vmax.f32 %v1138, 0.0
        %v1203 = vmax.f32 %v1139, 0.0
        %v1204 = vmax.f32 %v1140, 0.0
        %v1205 = vmax.f32 %v1141, 0.0
        %v1206 = vmax.f32 %v1142, 0.0
        %v1207 = vmax.f32 %v1143, 0.0
        %v1208 = vmax.f32 %v1144, 0.0
        %v1209 = vmax.f32 %v1145, 0.0
        %v1210 = vmax.f32 %v1146, 0.0
        %v1211 = vmax.f32 %v1147, 0.0
        %v1212 = vmax.f32 %v1148, 0.0
        %v1213 = vmax.f32 %v1149, 0.0
        %v1214 = vmax.f32 %v1150, 0.0
        %v1215 = vmax.f32 %v1151, 0.0
        %v1216 = vmax.f32 %v1152, 0.0
        %v1217 = vmax.f32 %v1153, 0.0
        %v1218 = vmax.f32 %v1154, 0.0
        %v1219 = vmax.f32 %v1155, 0.0
        %v1220 = vmax.f32 %v1156, 0.0
        %v1221 = vmax.f32 %v1157, 0.0
        %v1222 = vmax.f32 %v1158, 0.0
        %v1223 = vmax.f32 %v1159, 0.0
        %v1224 = vmax.f32 %v1160, 0.0
        %v1225 = vmax.f32 %v1161, 0.0
        %v1226 = vmax.f32 %v1162, 0.0
        %v1227 = vmax.f32 %v1163, 0.0
        %v1228 = vmax.f32 %v1164, 0.0
        %v1229 = vmax.f32 %v1165, 0.0
        %1230 = vst [vmem:[%s193] sm:$0xff] %v1166
        %1231 = vst [vmem:[%s193 + $0x8] sm:$0xff] %v1167
        %1232 = vst [vmem:[%s193 + $0x10] sm:$0xff] %v1168
        %1233 = vst [vmem:[%s193 + $0x18] sm:$0xff] %v1169
        %1234 = vst [vmem:[%s193 + $0x20] sm:$0xff] %v1170
        %1235 = vst [vmem:[%s193 + $0x28] sm:$0xff] %v1171
        %1236 = vst [vmem:[%s193 + $0x30] sm:$0xff] %v1172
        %1237 = vst [vmem:[%s193 + $0x38] sm:$0xff] %v1173
        %1238 = vst [vmem:[%s193 + $0x40] sm:$0xff] %v1174
        %1239 = vst [vmem:[%s193 + $0x48] sm:$0xff] %v1175
        %1240 = vst [vmem:[%s193 + $0x50] sm:$0xff] %v1176
        %1241 = vst [vmem:[%s193 + $0x58] sm:$0xff] %v1177
        %1242 = vst [vmem:[%s193 + $0x60] sm:$0xff] %v1178
        %1243 = vst [vmem:[%s193 + $0x68] sm:$0xff] %v1179
        %1244 = vst [vmem:[%s193 + $0x70] sm:$0xff] %v1180
        %1245 = vst [vmem:[%s193 + $0x78] sm:$0xff] %v1181
        %1246 = vst [vmem:[%s193 + $0x80] sm:$0xff] %v1182
        %1247 = vst [vmem:[%s193 + $0x88] sm:$0xff] %v1183
        %1248 = vst [vmem:[%s193 + $0x90] sm:$0xff] %v1184
        %1249 = vst [vmem:[%s193 + $0x98] sm:$0xff] %v1185
        %1250 = vst [vmem:[%s193 + $0xa0] sm:$0xff] %v1186
        %1251 = vst [vmem:[%s193 + $0xa8] sm:$0xff] %v1187
        %1252 = vst [vmem:[%s193 + $0xb0] sm:$0xff] %v1188
        %1253 = vst [vmem:[%s193 + $0xb8] sm:$0xff] %v1189
        %1254 = vst [vmem:[%s193 + $0xc0] sm:$0xff] %v1190
        %1255 = vst [vmem:[%s193 + $0xc8] sm:$0xff] %v1191
        %1256 = vst [vmem:[%s193 + $0xd0] sm:$0xff] %v1192
        %1257 = vst [vmem:[%s193 + $0xd8] sm:$0xff] %v1193
        %1258 = vst [vmem:[%s193 + $0xe0] sm:$0xff] %v1194
        %1259 = vst [vmem:[%s193 + $0xe8] sm:$0xff] %v1195
        %1260 = vst [vmem:[%s193 + $0xf0] sm:$0xff] %v1196
        %1261 = vst [vmem:[%s193 + $0xf8] sm:$0xff] %v1197
        %1262 = vst [vmem:[%s193 + $0x100] sm:$0xff] %v1198
        %1263 = vst [vmem:[%s193 + $0x108] sm:$0xff] %v1199
        %1264 = vst [vmem:[%s193 + $0x110] sm:$0xff] %v1200
        %1265 = vst [vmem:[%s193 + $0x118] sm:$0xff] %v1201
        %1266 = vst [vmem:[%s193 + $0x120] sm:$0xff] %v1202
        %1267 = vst [vmem:[%s193 + $0x128] sm:$0xff] %v1203
        %1268 = vst [vmem:[%s193 + $0x130] sm:$0xff] %v1204
        %1269 = vst [vmem:[%s193 + $0x138] sm:$0xff] %v1205
        %1270 = vst [vmem:[%s193 + $0x140] sm:$0xff] %v1206
        %1271 = vst [vmem:[%s193 + $0x148] sm:$0xff] %v1207
        %1272 = vst [vmem:[%s193 + $0x150] sm:$0xff] %v1208
        %1273 = vst [vmem:[%s193 + $0x158] sm:$0xff] %v1209
        %1274 = vst [vmem:[%s193 + $0x160] sm:$0xff] %v1210
        %1275 = vst [vmem:[%s193 + $0x168] sm:$0xff] %v1211
        %1276 = vst [vmem:[%s193 + $0x170] sm:$0xff] %v1212
        %1277 = vst [vmem:[%s193 + $0x178] sm:$0xff] %v1213
        %1278 = vst [vmem:[%s193 + $0x180] sm:$0xff] %v1214
        %1279 = vst [vmem:[%s193 + $0x188] sm:$0xff] %v1215
        %1280 = vst [vmem:[%s193 + $0x190] sm:$0xff] %v1216
        %1281 = vst [vmem:[%s193 + $0x198] sm:$0xff] %v1217
        %1282 = vst [vmem:[%s193 + $0x1a0] sm:$0xff] %v1218
        %1283 = vst [vmem:[%s193 + $0x1a8] sm:$0xff] %v1219
        %1284 = vst [vmem:[%s193 + $0x1b0] sm:$0xff] %v1220
        %1285 = vst [vmem:[%s193 + $0x1b8] sm:$0xff] %v1221
        %1286 = vst [vmem:[%s193 + $0x1c0] sm:$0xff] %v1222
        %1287 = vst [vmem:[%s193 + $0x1c8] sm:$0xff] %v1223
        %1288 = vst [vmem:[%s193 + $0x1d0] sm:$0xff] %v1224
        %1289 = vst [vmem:[%s193 + $0x1d8] sm:$0xff] %v1225
        %1290 = vst [vmem:[%s193 + $0x1e0] sm:$0xff] %v1226
        %1291 = vst [vmem:[%s193 + $0x1e8] sm:$0xff] %v1227
        %1292 = vst [vmem:[%s193 + $0x1f0] sm:$0xff] %v1228
        %1293 = vst [vmem:[%s193 + $0x1f8] sm:$0xff] %v1229
        %s1294 = sand.u32 %s115, 1
        %s1295 = scalar_lea.sflag [#allocation3], %s1294
        %s1296 = sand.u32 %s115, 1
        %s1297 = smul.addr %s1296, 512
        %s1298 = scalar_lea.vmem [#allocation2], %s1297
        // Predicated region
        $region37: #{tpu_custom_call.1} parent=35 // pred_check
          %p1299 = pneg %p125
        $region38: #{tpu_custom_call.1} parent=35 // pred_check_branch
          %1301 = sbr.rel (%p1299) target = $region40
        $region39: #{tpu_custom_call.1} parent=35 // pred_region
          %s1302 = smul.u32 64, %s18
          %s1304 = ssub.s32 8192, 8192
          %1305 = vsyncadd %s1295, %s1304
          %s1306 = smul.addr %s1302, 128
          %s1307 = scalar_lea.hbm %s4, %s1306
          %s1308 = sshll.u32 %s1298, 4
          %s1309 = int_to_ptr.vmem [resolvable:$true] %s1308
          %1314 = dma.vmem_to_hbm [thread:$0]  %s1309, 8192, %s1307, %s1295, 128, 128, 8
        $region40: #{tpu_custom_call.1} parent=35 // pred_fallthru
          _
      $region36: #{tpu_custom_call.1} parent=5 // pred_fallthru
        _
      %p1315 = scmp.le.s32.totalorder 2, %s13
      // Predicated region
      $region41: #{tpu_custom_call.1} parent=5 // pred_check
        %p1316 = pneg %p1315
      $region42: #{tpu_custom_call.1} parent=5 // pred_check_branch
        %1318 = sbr.rel (%p1316) target = $region44
      $region43: #{tpu_custom_call.1} parent=5 // pred_region
        %s1319 = ssub.s32 %s13, 2
        // Predicated region
        $region45: #{tpu_custom_call.1} parent=43 // pred_check
          %p1320 = pneg %p131
        $region46: #{tpu_custom_call.1} parent=43 // pred_check_branch
          %1322 = sbr.rel (%p1320) target = $region48
        $region47: #{tpu_custom_call.1} parent=43 // pred_region
          %s1323 = sand.u32 %s116, 1
          %s1324 = scalar_lea.sflag [#allocation3], %s1323
          %s1325 = sand.u32 %s116, 1
          %s1326 = smul.addr %s1325, 512
          %s1327 = scalar_lea.vmem [#allocation2], %s1326
          %1328 = dma.done %s1324, 8192
        $region48: #{tpu_custom_call.1} parent=43 // pred_fallthru
          _
      $region44: #{tpu_custom_call.1} parent=5 // pred_fallthru
        _
    $region6: #{tpu_custom_call.1} parent=1 // loop_footer
      %s17 = sadd.s32 1, %s13
    $region7: #{tpu_custom_call.1} parent=1 // loop_footer_branch
      %12 = sbr.rel target = $region3
    $region8: #{tpu_custom_call.1} parent=1 // loop_exit
      _
    %1329 = vsyncpa [#allocation3], 1
    %s1330 = scalar_lea.sflag [#allocation3], 1
    %1331 = vsyncpa %s1330, 1

</llo_original>
